<compile_context>
chip_gen: v5e
topology: v5e:2x2
jax: 0.10.0
libtpu: 0.0.40
codegen_flags: <defaults>
</compile_context>

<pallas_src>
import jax
import jax.numpy as jnp
from jax.experimental import pallas as pl
from jax.experimental.pallas import tpu as pltpu


def _tpu_vmem_capacity_bytes():
    """Physical VMEM of the current chip; conservative 64 MiB fallback (v7x)."""
    try:
        cap = getattr(pltpu.get_tpu_info(), "vmem_capacity_bytes", None)
        if cap:
            return int(cap)
    except Exception:
        pass
    return 64 * 2**20


def _row_bytes(h, c):
    """VMEM bytes per M-row: bf16 input slab (x2 bufs) + f32 output slab (x2) + f32 state."""
    return 2 * h * c * 2 + 2 * h * c * 4 + c * 4


def _const_bytes(c):
    """Single-buffered bf16 weight + f32 bias (pl.Buffered(1))."""
    return c * c * 2 + c * 4


def _pick_tm(m, h, c, budget):
    """Largest MXU-friendly M-tile within the VMEM budget, with >=2 grid steps."""
    cap = max((budget - _const_bytes(c)) // _row_bytes(h, c), 8)
    half = pl.cdiv(m, 2)            # >=2 tiles so v7x's two TCs both get work
    tm = min(cap, half)
    if tm >= 256:                   # v6e/v7x MXU: 2x 256x256 tiles
        tm = (tm // 256) * 256
    elif tm >= 128:                 # v5e MXU: 4x 128x128 tiles
        tm = (tm // 128) * 128
    else:                           # VMEM-capped: 8-sublane minimum
        tm = max((tm // 8) * 8, 8)
    return min(tm, m)               # a block dim equal to the full dim is always legal


def _conv_du_kernel(w_ref, b_ref, x_ref, o_ref, state_ref):
    """Fused top->bottom + bottom->top recurrence over H for one M-tile.

    x_ref:     (H, TM, C) bf16 input slab for this M-tile.
    o_ref:     (H, TM, C) f32 output slab (updated in place by the up-pass).
    w_ref:     (C, C)  bf16 center-tap weight, laid out for x @ W.
    b_ref:     (1, C)  f32 bias.
    state_ref: (TM, C) f32 carried recurrence state.
    """
    hh, tm, c = x_ref.shape

    # Hoisted once: weight value and the (TM, C) bias broadcast (broadcast_in_dim
    # is not CSE'd, so leaving it inside `step` re-emits it every unrolled step).
    w = w_ref[...]
    bias = jnp.broadcast_to(b_ref[...], (tm, c))

    def step(prev_f32, add_f32):
        # bf16 MXU operands, f32 accumulation, f32 state/output.
        conv = jnp.dot(prev_f32.astype(jnp.bfloat16), w,
                       preferred_element_type=jnp.float32) + bias
        return jnp.maximum(conv, 0.0) + add_f32

    first = x_ref[0].astype(jnp.float32)
    o_ref[0] = first
    state_ref[...] = first

    # Full unroll for short recurrences, partial unroll otherwise (keeps the
    # scheduler able to overlap epilogue and next matmul without blowing up
    # compile time / code size for deep H).
    unroll = True if hh <= 32 else 4

    def fwd(i, carry):                          # rows 1 .. H-1
        new = step(state_ref[...], x_ref[i].astype(jnp.float32))
        o_ref[i] = new
        state_ref[...] = new
        return carry

    jax.lax.fori_loop(1, hh, fwd, 0, unroll=unroll)

    # state_ref now holds row H-1; sweep back up, updating rows in place.
    def bwd(i, carry):                          # rows H-2 .. 0
        row = hh - 2 - i
        new = step(state_ref[...], o_ref[row])
        o_ref[row] = new
        state_ref[...] = new
        return carry

    jax.lax.fori_loop(0, hh - 1, bwd, 0, unroll=unroll)


@jax.jit
def conv_du_forward(fea_nchw, conv_weight, conv_bias):
    """Pallas implementation of convDU.forward.

    fea_nchw:    (N, C, H, W) float32
    conv_weight: (C, C, KH, 1) float32   (only center tap KH//2 is ever used)
    conv_bias:   (C,) float32
    returns:     (N, C, H, W) float32
    """
    n, c, h, w = fea_nchw.shape
    m = n * w

    # NCHW -> (H, N*W, C) channels-last slab, bf16 (halves slab VMEM + DMA).
    # Production C (2048) is a multiple of 128, so the C-last layout gives
    # lane-dense, unmasked stores.
    # TODO(synk): keep activations channels-last (and bf16) through the
    # surrounding model so these full-tensor transposes (extra HBM passes)
    # disappear entirely; at C=2048 the kernel is firmly MXU-bound so they are
    # a small fraction of wall-clock today.
    slab = jnp.transpose(fea_nchw, (2, 0, 3, 1)).reshape(h, m, c).astype(jnp.bfloat16)

    kh = conv_weight.shape[2]
    w_center = conv_weight[:, :, (kh - 1) // 2, 0]        # (C_out, C_in)
    w_t = jnp.transpose(w_center).astype(jnp.bfloat16)    # (C_in, C_out): x @ w_t
    b = conv_bias.reshape(1, c).astype(jnp.float32)

    cap = _tpu_vmem_capacity_bytes()
    budget = max(int(cap * 0.75), cap - (32 << 20))       # ~96 MiB v5e/v6e, ~48 MiB v7x
    tm = _pick_tm(m, h, c, budget)
    needed = _const_bytes(c) + _row_bytes(h, c) * tm
    vmem_limit = int(min(cap - (1 << 20), needed + (32 << 20)))

    out = pl.pallas_call(
        _conv_du_kernel,
        out_shape=jax.ShapeDtypeStruct((h, m, c), jnp.float32),
        grid=(pl.cdiv(m, tm),),                 # ragged last block is masked
        in_specs=[
            # Constant operands: single-buffered (index_map never changes).
            pl.BlockSpec((c, c), lambda i: (0, 0), pipeline_mode=pl.Buffered(1)),
            pl.BlockSpec((1, c), lambda i: (0, 0), pipeline_mode=pl.Buffered(1)),
            # Full-H activation slab for M-tile i (double-buffered by default).
            pl.BlockSpec((h, tm, c), lambda i: (0, i, 0)),
        ],
        out_specs=pl.BlockSpec((h, tm, c), lambda i: (0, i, 0)),
        scratch_shapes=[pltpu.VMEM((tm, c), jnp.float32)],  # f32 recurrence state
        compiler_params=pltpu.CompilerParams(
            dimension_semantics=("parallel",),   # M-tiles are independent (megacore)
            vmem_limit_bytes=vmem_limit,
        ),
    )(w_t, b, slab)

    # (H, N*W, C) -> (N, C, H, W)
    return out.reshape(h, n, w, c).transpose(1, 3, 0, 2)


def conv_du_reference(fea, conv_weight, conv_bias):
    """Pure-JAX reference mirroring the PyTorch forward exactly (all f32)."""
    n, c, h, w = fea.shape
    kh = conv_weight.shape[2]
    wc = conv_weight[:, :, (kh - 1) // 2, 0]              # (C_out, C_in)

    def conv1(x):  # x: (n, c, w) -> ReLU(conv) with only the center tap active
        y = jnp.einsum('oc,ncw->now', wc, x) + conv_bias[None, :, None]
        return jnp.maximum(y, 0.0)

    stack = [fea[:, :, 0, :]]
    for i in range(1, h):
        stack.append(conv1(stack[i - 1]) + fea[:, :, i, :])
    for i in range(h - 2, -1, -1):
        stack[i] = conv1(stack[i + 1]) + stack[i]
    return jnp.stack(stack, axis=2)


if __name__ == "__main__":
    key = jax.random.PRNGKey(0)
    k_x, k_w, k_b = jax.random.split(key, 3)

    N, C, H, W = 2, 32, 16, 16        # small shapes (module default C=2048)
    KH, KW = 9, 1

    x = jax.random.normal(k_x, (N, C, H, W), dtype=jnp.float32)
    conv_weight = 0.05 * jax.random.normal(k_w, (C, C, KH, KW), dtype=jnp.float32)
    conv_bias = 0.01 * jax.random.normal(k_b, (C,), dtype=jnp.float32)

    out = conv_du_forward(x, conv_weight, conv_bias)
    out = jax.block_until_ready(out)

    ref = conv_du_reference(x, conv_weight, conv_bias)
    assert out.shape == (N, C, H, W)
    # Tolerance reflects bf16 MXU inputs + bf16 activation slab (state,
    # accumulation and output stay f32).
    max_err = jnp.max(jnp.abs(out - ref))
    assert jnp.allclose(out, ref, atol=2e-2, rtol=2e-2), f"mismatch vs reference: {max_err}"

    print("KERNEL_OK")
</pallas_src>

<mosaic_0001>
module attributes {stable_mosaic.version = 11 : i64} {
  func.func @_conv_du_kernel(%arg0: i32, %arg1: memref<32x32xbf16, #tpu.memory_space<vmem>>, %arg2: memref<1x32xf32, #tpu.memory_space<vmem>>, %arg3: memref<16x16x32xbf16, #tpu.memory_space<vmem>>, %arg4: memref<16x16x32xf32, #tpu.memory_space<vmem>>, %arg5: memref<16x32xf32, #tpu.memory_space<vmem>>) attributes {dimension_semantics = [#tpu.dimension_semantics<parallel>], iteration_bounds = array<i64: 2>, scalar_prefetch = 0 : i64, scratch_operands = 1 : i64, tpu.core_type = #tpu.core_type<tc>, window_params = [{pipeline_mode = #tpu.pipeline_mode<synchronous>, transform_indices = @transform_0, window_bounds = array<i64: 32, 32>}, {pipeline_mode = #tpu.pipeline_mode<synchronous>, transform_indices = @transform_1, window_bounds = array<i64: 1, 32>}, {transform_indices = @transform_2, window_bounds = array<i64: 16, 16, 32>}, {transform_indices = @transform_3, window_bounds = array<i64: 16, 16, 32>}]} {
    %c0 = arith.constant 0 : index
    %c0_0 = arith.constant 0 : index
    %0 = vector.load %arg1[%c0, %c0_0] : memref<32x32xbf16, #tpu.memory_space<vmem>>, vector<32x32xbf16>
    %c0_1 = arith.constant 0 : index
    %c0_2 = arith.constant 0 : index
    %1 = vector.load %arg2[%c0_1, %c0_2] : memref<1x32xf32, #tpu.memory_space<vmem>>, vector<1x32xf32>
    %2 = vector.shape_cast %1 : vector<1x32xf32> to vector<1x32xf32>
    %3 = vector.broadcast %2 : vector<1x32xf32> to vector<16x32xf32>
    %c0_3 = arith.constant 0 : index
    %c0_4 = arith.constant 0 : index
    %c0_5 = arith.constant 0 : index
    %4 = vector.load %arg3[%c0_3, %c0_4, %c0_5] : memref<16x16x32xbf16, #tpu.memory_space<vmem>>, vector<1x16x32xbf16>
    %5 = vector.shape_cast %4 : vector<1x16x32xbf16> to vector<16x32xbf16>
    %6 = arith.extf %5 : vector<16x32xbf16> to vector<16x32xf32>
    %c0_6 = arith.constant 0 : index
    %c0_7 = arith.constant 0 : index
    %c0_8 = arith.constant 0 : index
    %7 = vector.load %arg4[%c0_6, %c0_7, %c0_8] : memref<16x16x32xf32, #tpu.memory_space<vmem>>, vector<1x16x32xf32>
    %8 = vector.shape_cast %7 : vector<1x16x32xf32> to vector<16x32xf32>
    %9 = vector.shape_cast %6 : vector<16x32xf32> to vector<1x16x32xf32>
    tpu.vector_store %arg4[%c0_6, %c0_7, %c0_8], %9 {strides = array<i32>} : memref<16x16x32xf32, #tpu.memory_space<vmem>>, vector<1x16x32xf32>,
    %c0_9 = arith.constant 0 : index
    %c0_10 = arith.constant 0 : index
    %10 = vector.load %arg5[%c0_9, %c0_10] : memref<16x32xf32, #tpu.memory_space<vmem>>, vector<16x32xf32>
    tpu.vector_store %arg5[%c0_9, %c0_10], %6 {strides = array<i32>} : memref<16x32xf32, #tpu.memory_space<vmem>>, vector<16x32xf32>,
    %c1_i32 = arith.constant 1 : i32
    %c0_11 = arith.constant 0 : index
    %c0_12 = arith.constant 0 : index
    %11 = vector.load %arg5[%c0_11, %c0_12] : memref<16x32xf32, #tpu.memory_space<vmem>>, vector<16x32xf32>
    %12 = arith.index_cast %c1_i32 : i32 to index
    %c0_13 = arith.constant 0 : index
    %c0_14 = arith.constant 0 : index
    %13 = vector.load %arg3[%12, %c0_13, %c0_14] : memref<16x16x32xbf16, #tpu.memory_space<vmem>>, vector<1x16x32xbf16>
    %14 = vector.shape_cast %13 : vector<1x16x32xbf16> to vector<16x32xbf16>
    %15 = arith.extf %14 : vector<16x32xbf16> to vector<16x32xf32>
    %16 = arith.truncf %11 : vector<16x32xf32> to vector<16x32xbf16>
    %cst = arith.constant dense<0.000000e+00> : vector<16x32xf32>
    %17 = tpu.matmul %16, %0, %cst {dimension_numbers = #tpu.dot_dimension_numbers<[1], [0], [0], [1], [0, 0, 1, 1], [], []>} : vector<16x32xbf16>, vector<32x32xbf16>, vector<16x32xf32> -> vector<16x32xf32>
    %18 = arith.addf %17, %3 : vector<16x32xf32>
    %cst_15 = arith.constant 0.000000e+00 : f32
    %19 = vector.broadcast %cst_15 : f32 to vector<16x32xf32>
    %20 = arith.maximumf %18, %19 : vector<16x32xf32>
    %21 = arith.addf %20, %15 : vector<16x32xf32>
    %22 = arith.index_cast %c1_i32 : i32 to index
    %c0_16 = arith.constant 0 : index
    %c0_17 = arith.constant 0 : index
    %23 = vector.load %arg4[%22, %c0_16, %c0_17] : memref<16x16x32xf32, #tpu.memory_space<vmem>>, vector<1x16x32xf32>
    %24 = vector.shape_cast %23 : vector<1x16x32xf32> to vector<16x32xf32>
    %25 = vector.shape_cast %21 : vector<16x32xf32> to vector<1x16x32xf32>
    tpu.vector_store %arg4[%22, %c0_16, %c0_17], %25 {strides = array<i32>} : memref<16x16x32xf32, #tpu.memory_space<vmem>>, vector<1x16x32xf32>,
    %c0_18 = arith.constant 0 : index
    %c0_19 = arith.constant 0 : index
    %26 = vector.load %arg5[%c0_18, %c0_19] : memref<16x32xf32, #tpu.memory_space<vmem>>, vector<16x32xf32>
    tpu.vector_store %arg5[%c0_18, %c0_19], %21 {strides = array<i32>} : memref<16x32xf32, #tpu.memory_space<vmem>>, vector<16x32xf32>,
    %c2_i32 = arith.constant 2 : i32
    %c0_20 = arith.constant 0 : index
    %c0_21 = arith.constant 0 : index
    %27 = vector.load %arg5[%c0_20, %c0_21] : memref<16x32xf32, #tpu.memory_space<vmem>>, vector<16x32xf32>
    %28 = arith.index_cast %c2_i32 : i32 to index
    %c0_22 = arith.constant 0 : index
    %c0_23 = arith.constant 0 : index
    %29 = vector.load %arg3[%28, %c0_22, %c0_23] : memref<16x16x32xbf16, #tpu.memory_space<vmem>>, vector<1x16x32xbf16>
    %30 = vector.shape_cast %29 : vector<1x16x32xbf16> to vector<16x32xbf16>
    %31 = arith.extf %30 : vector<16x32xbf16> to vector<16x32xf32>
    %32 = arith.truncf %27 : vector<16x32xf32> to vector<16x32xbf16>
    %cst_24 = arith.constant dense<0.000000e+00> : vector<16x32xf32>
    %33 = tpu.matmul %32, %0, %cst_24 {dimension_numbers = #tpu.dot_dimension_numbers<[1], [0], [0], [1], [0, 0, 1, 1], [], []>} : vector<16x32xbf16>, vector<32x32xbf16>, vector<16x32xf32> -> vector<16x32xf32>
    %34 = arith.addf %33, %3 : vector<16x32xf32>
    %cst_25 = arith.constant 0.000000e+00 : f32
    %35 = vector.broadcast %cst_25 : f32 to vector<16x32xf32>
    %36 = arith.maximumf %34, %35 : vector<16x32xf32>
    %37 = arith.addf %36, %31 : vector<16x32xf32>
    %38 = arith.index_cast %c2_i32 : i32 to index
    %c0_26 = arith.constant 0 : index
    %c0_27 = arith.constant 0 : index
    %39 = vector.load %arg4[%38, %c0_26, %c0_27] : memref<16x16x32xf32, #tpu.memory_space<vmem>>, vector<1x16x32xf32>
    %40 = vector.shape_cast %39 : vector<1x16x32xf32> to vector<16x32xf32>
    %41 = vector.shape_cast %37 : vector<16x32xf32> to vector<1x16x32xf32>
    tpu.vector_store %arg4[%38, %c0_26, %c0_27], %41 {strides = array<i32>} : memref<16x16x32xf32, #tpu.memory_space<vmem>>, vector<1x16x32xf32>,
    %c0_28 = arith.constant 0 : index
    %c0_29 = arith.constant 0 : index
    %42 = vector.load %arg5[%c0_28, %c0_29] : memref<16x32xf32, #tpu.memory_space<vmem>>, vector<16x32xf32>
    tpu.vector_store %arg5[%c0_28, %c0_29], %37 {strides = array<i32>} : memref<16x32xf32, #tpu.memory_space<vmem>>, vector<16x32xf32>,
    %c3_i32 = arith.constant 3 : i32
    %c0_30 = arith.constant 0 : index
    %c0_31 = arith.constant 0 : index
    %43 = vector.load %arg5[%c0_30, %c0_31] : memref<16x32xf32, #tpu.memory_space<vmem>>, vector<16x32xf32>
    %44 = arith.index_cast %c3_i32 : i32 to index
    %c0_32 = arith.constant 0 : index
    %c0_33 = arith.constant 0 : index
    %45 = vector.load %arg3[%44, %c0_32, %c0_33] : memref<16x16x32xbf16, #tpu.memory_space<vmem>>, vector<1x16x32xbf16>
    %46 = vector.shape_cast %45 : vector<1x16x32xbf16> to vector<16x32xbf16>
    %47 = arith.extf %46 : vector<16x32xbf16> to vector<16x32xf32>
    %48 = arith.truncf %43 : vector<16x32xf32> to vector<16x32xbf16>
    %cst_34 = arith.constant dense<0.000000e+00> : vector<16x32xf32>
    %49 = tpu.matmul %48, %0, %cst_34 {dimension_numbers = #tpu.dot_dimension_numbers<[1], [0], [0], [1], [0, 0, 1, 1], [], []>} : vector<16x32xbf16>, vector<32x32xbf16>, vector<16x32xf32> -> vector<16x32xf32>
    %50 = arith.addf %49, %3 : vector<16x32xf32>
    %cst_35 = arith.constant 0.000000e+00 : f32
    %51 = vector.broadcast %cst_35 : f32 to vector<16x32xf32>
    %52 = arith.maximumf %50, %51 : vector<16x32xf32>
    %53 = arith.addf %52, %47 : vector<16x32xf32>
    %54 = arith.index_cast %c3_i32 : i32 to index
    %c0_36 = arith.constant 0 : index
    %c0_37 = arith.constant 0 : index
    %55 = vector.load %arg4[%54, %c0_36, %c0_37] : memref<16x16x32xf32, #tpu.memory_space<vmem>>, vector<1x16x32xf32>
    %56 = vector.shape_cast %55 : vector<1x16x32xf32> to vector<16x32xf32>
    %57 = vector.shape_cast %53 : vector<16x32xf32> to vector<1x16x32xf32>
    tpu.vector_store %arg4[%54, %c0_36, %c0_37], %57 {strides = array<i32>} : memref<16x16x32xf32, #tpu.memory_space<vmem>>, vector<1x16x32xf32>,
    %c0_38 = arith.constant 0 : index
    %c0_39 = arith.constant 0 : index
    %58 = vector.load %arg5[%c0_38, %c0_39] : memref<16x32xf32, #tpu.memory_space<vmem>>, vector<16x32xf32>
    tpu.vector_store %arg5[%c0_38, %c0_39], %53 {strides = array<i32>} : memref<16x32xf32, #tpu.memory_space<vmem>>, vector<16x32xf32>,
    %c4_i32 = arith.constant 4 : i32
    %c0_40 = arith.constant 0 : index
    %c0_41 = arith.constant 0 : index
    %59 = vector.load %arg5[%c0_40, %c0_41] : memref<16x32xf32, #tpu.memory_space<vmem>>, vector<16x32xf32>
    %60 = arith.index_cast %c4_i32 : i32 to index
    %c0_42 = arith.constant 0 : index
    %c0_43 = arith.constant 0 : index
    %61 = vector.load %arg3[%60, %c0_42, %c0_43] : memref<16x16x32xbf16, #tpu.memory_space<vmem>>, vector<1x16x32xbf16>
    %62 = vector.shape_cast %61 : vector<1x16x32xbf16> to vector<16x32xbf16>
    %63 = arith.extf %62 : vector<16x32xbf16> to vector<16x32xf32>
    %64 = arith.truncf %59 : vector<16x32xf32> to vector<16x32xbf16>
    %cst_44 = arith.constant dense<0.000000e+00> : vector<16x32xf32>
    %65 = tpu.matmul %64, %0, %cst_44 {dimension_numbers = #tpu.dot_dimension_numbers<[1], [0], [0], [1], [0, 0, 1, 1], [], []>} : vector<16x32xbf16>, vector<32x32xbf16>, vector<16x32xf32> -> vector<16x32xf32>
    %66 = arith.addf %65, %3 : vector<16x32xf32>
    %cst_45 = arith.constant 0.000000e+00 : f32
    %67 = vector.broadcast %cst_45 : f32 to vector<16x32xf32>
    %68 = arith.maximumf %66, %67 : vector<16x32xf32>
    %69 = arith.addf %68, %63 : vector<16x32xf32>
    %70 = arith.index_cast %c4_i32 : i32 to index
    %c0_46 = arith.constant 0 : index
    %c0_47 = arith.constant 0 : index
    %71 = vector.load %arg4[%70, %c0_46, %c0_47] : memref<16x16x32xf32, #tpu.memory_space<vmem>>, vector<1x16x32xf32>
    %72 = vector.shape_cast %71 : vector<1x16x32xf32> to vector<16x32xf32>
    %73 = vector.shape_cast %69 : vector<16x32xf32> to vector<1x16x32xf32>
    tpu.vector_store %arg4[%70, %c0_46, %c0_47], %73 {strides = array<i32>} : memref<16x16x32xf32, #tpu.memory_space<vmem>>, vector<1x16x32xf32>,
    %c0_48 = arith.constant 0 : index
    %c0_49 = arith.constant 0 : index
    %74 = vector.load %arg5[%c0_48, %c0_49] : memref<16x32xf32, #tpu.memory_space<vmem>>, vector<16x32xf32>
    tpu.vector_store %arg5[%c0_48, %c0_49], %69 {strides = array<i32>} : memref<16x32xf32, #tpu.memory_space<vmem>>, vector<16x32xf32>,
    %c5_i32 = arith.constant 5 : i32
    %c0_50 = arith.constant 0 : index
    %c0_51 = arith.constant 0 : index
    %75 = vector.load %arg5[%c0_50, %c0_51] : memref<16x32xf32, #tpu.memory_space<vmem>>, vector<16x32xf32>
    %76 = arith.index_cast %c5_i32 : i32 to index
    %c0_52 = arith.constant 0 : index
    %c0_53 = arith.constant 0 : index
    %77 = vector.load %arg3[%76, %c0_52, %c0_53] : memref<16x16x32xbf16, #tpu.memory_space<vmem>>, vector<1x16x32xbf16>
    %78 = vector.shape_cast %77 : vector<1x16x32xbf16> to vector<16x32xbf16>
    %79 = arith.extf %78 : vector<16x32xbf16> to vector<16x32xf32>
    %80 = arith.truncf %75 : vector<16x32xf32> to vector<16x32xbf16>
    %cst_54 = arith.constant dense<0.000000e+00> : vector<16x32xf32>
    %81 = tpu.matmul %80, %0, %cst_54 {dimension_numbers = #tpu.dot_dimension_numbers<[1], [0], [0], [1], [0, 0, 1, 1], [], []>} : vector<16x32xbf16>, vector<32x32xbf16>, vector<16x32xf32> -> vector<16x32xf32>
    %82 = arith.addf %81, %3 : vector<16x32xf32>
    %cst_55 = arith.constant 0.000000e+00 : f32
    %83 = vector.broadcast %cst_55 : f32 to vector<16x32xf32>
    %84 = arith.maximumf %82, %83 : vector<16x32xf32>
    %85 = arith.addf %84, %79 : vector<16x32xf32>
    %86 = arith.index_cast %c5_i32 : i32 to index
    %c0_56 = arith.constant 0 : index
    %c0_57 = arith.constant 0 : index
    %87 = vector.load %arg4[%86, %c0_56, %c0_57] : memref<16x16x32xf32, #tpu.memory_space<vmem>>, vector<1x16x32xf32>
    %88 = vector.shape_cast %87 : vector<1x16x32xf32> to vector<16x32xf32>
    %89 = vector.shape_cast %85 : vector<16x32xf32> to vector<1x16x32xf32>
    tpu.vector_store %arg4[%86, %c0_56, %c0_57], %89 {strides = array<i32>} : memref<16x16x32xf32, #tpu.memory_space<vmem>>, vector<1x16x32xf32>,
    %c0_58 = arith.constant 0 : index
    %c0_59 = arith.constant 0 : index
    %90 = vector.load %arg5[%c0_58, %c0_59] : memref<16x32xf32, #tpu.memory_space<vmem>>, vector<16x32xf32>
    tpu.vector_store %arg5[%c0_58, %c0_59], %85 {strides = array<i32>} : memref<16x32xf32, #tpu.memory_space<vmem>>, vector<16x32xf32>,
    %c6_i32 = arith.constant 6 : i32
    %c0_60 = arith.constant 0 : index
    %c0_61 = arith.constant 0 : index
    %91 = vector.load %arg5[%c0_60, %c0_61] : memref<16x32xf32, #tpu.memory_space<vmem>>, vector<16x32xf32>
    %92 = arith.index_cast %c6_i32 : i32 to index
    %c0_62 = arith.constant 0 : index
    %c0_63 = arith.constant 0 : index
    %93 = vector.load %arg3[%92, %c0_62, %c0_63] : memref<16x16x32xbf16, #tpu.memory_space<vmem>>, vector<1x16x32xbf16>
    %94 = vector.shape_cast %93 : vector<1x16x32xbf16> to vector<16x32xbf16>
    %95 = arith.extf %94 : vector<16x32xbf16> to vector<16x32xf32>
    %96 = arith.truncf %91 : vector<16x32xf32> to vector<16x32xbf16>
    %cst_64 = arith.constant dense<0.000000e+00> : vector<16x32xf32>
    %97 = tpu.matmul %96, %0, %cst_64 {dimension_numbers = #tpu.dot_dimension_numbers<[1], [0], [0], [1], [0, 0, 1, 1], [], []>} : vector<16x32xbf16>, vector<32x32xbf16>, vector<16x32xf32> -> vector<16x32xf32>
    %98 = arith.addf %97, %3 : vector<16x32xf32>
    %cst_65 = arith.constant 0.000000e+00 : f32
    %99 = vector.broadcast %cst_65 : f32 to vector<16x32xf32>
    %100 = arith.maximumf %98, %99 : vector<16x32xf32>
    %101 = arith.addf %100, %95 : vector<16x32xf32>
    %102 = arith.index_cast %c6_i32 : i32 to index
    %c0_66 = arith.constant 0 : index
    %c0_67 = arith.constant 0 : index
    %103 = vector.load %arg4[%102, %c0_66, %c0_67] : memref<16x16x32xf32, #tpu.memory_space<vmem>>, vector<1x16x32xf32>
    %104 = vector.shape_cast %103 : vector<1x16x32xf32> to vector<16x32xf32>
    %105 = vector.shape_cast %101 : vector<16x32xf32> to vector<1x16x32xf32>
    tpu.vector_store %arg4[%102, %c0_66, %c0_67], %105 {strides = array<i32>} : memref<16x16x32xf32, #tpu.memory_space<vmem>>, vector<1x16x32xf32>,
    %c0_68 = arith.constant 0 : index
    %c0_69 = arith.constant 0 : index
    %106 = vector.load %arg5[%c0_68, %c0_69] : memref<16x32xf32, #tpu.memory_space<vmem>>, vector<16x32xf32>
    tpu.vector_store %arg5[%c0_68, %c0_69], %101 {strides = array<i32>} : memref<16x32xf32, #tpu.memory_space<vmem>>, vector<16x32xf32>,
    %c7_i32 = arith.constant 7 : i32
    %c0_70 = arith.constant 0 : index
    %c0_71 = arith.constant 0 : index
    %107 = vector.load %arg5[%c0_70, %c0_71] : memref<16x32xf32, #tpu.memory_space<vmem>>, vector<16x32xf32>
    %108 = arith.index_cast %c7_i32 : i32 to index
    %c0_72 = arith.constant 0 : index
    %c0_73 = arith.constant 0 : index
    %109 = vector.load %arg3[%108, %c0_72, %c0_73] : memref<16x16x32xbf16, #tpu.memory_space<vmem>>, vector<1x16x32xbf16>
    %110 = vector.shape_cast %109 : vector<1x16x32xbf16> to vector<16x32xbf16>
    %111 = arith.extf %110 : vector<16x32xbf16> to vector<16x32xf32>
    %112 = arith.truncf %107 : vector<16x32xf32> to vector<16x32xbf16>
    %cst_74 = arith.constant dense<0.000000e+00> : vector<16x32xf32>
    %113 = tpu.matmul %112, %0, %cst_74 {dimension_numbers = #tpu.dot_dimension_numbers<[1], [0], [0], [1], [0, 0, 1, 1], [], []>} : vector<16x32xbf16>, vector<32x32xbf16>, vector<16x32xf32> -> vector<16x32xf32>
    %114 = arith.addf %113, %3 : vector<16x32xf32>
    %cst_75 = arith.constant 0.000000e+00 : f32
    %115 = vector.broadcast %cst_75 : f32 to vector<16x32xf32>
    %116 = arith.maximumf %114, %115 : vector<16x32xf32>
    %117 = arith.addf %116, %111 : vector<16x32xf32>
    %118 = arith.index_cast %c7_i32 : i32 to index
    %c0_76 = arith.constant 0 : index
    %c0_77 = arith.constant 0 : index
    %119 = vector.load %arg4[%118, %c0_76, %c0_77] : memref<16x16x32xf32, #tpu.memory_space<vmem>>, vector<1x16x32xf32>
    %120 = vector.shape_cast %119 : vector<1x16x32xf32> to vector<16x32xf32>
    %121 = vector.shape_cast %117 : vector<16x32xf32> to vector<1x16x32xf32>
    tpu.vector_store %arg4[%118, %c0_76, %c0_77], %121 {strides = array<i32>} : memref<16x16x32xf32, #tpu.memory_space<vmem>>, vector<1x16x32xf32>,
    %c0_78 = arith.constant 0 : index
    %c0_79 = arith.constant 0 : index
    %122 = vector.load %arg5[%c0_78, %c0_79] : memref<16x32xf32, #tpu.memory_space<vmem>>, vector<16x32xf32>
    tpu.vector_store %arg5[%c0_78, %c0_79], %117 {strides = array<i32>} : memref<16x32xf32, #tpu.memory_space<vmem>>, vector<16x32xf32>,
    %c8_i32 = arith.constant 8 : i32
    %c0_80 = arith.constant 0 : index
    %c0_81 = arith.constant 0 : index
    %123 = vector.load %arg5[%c0_80, %c0_81] : memref<16x32xf32, #tpu.memory_space<vmem>>, vector<16x32xf32>
    %124 = arith.index_cast %c8_i32 : i32 to index
    %c0_82 = arith.constant 0 : index
    %c0_83 = arith.constant 0 : index
    %125 = vector.load %arg3[%124, %c0_82, %c0_83] : memref<16x16x32xbf16, #tpu.memory_space<vmem>>, vector<1x16x32xbf16>
    %126 = vector.shape_cast %125 : vector<1x16x32xbf16> to vector<16x32xbf16>
    %127 = arith.extf %126 : vector<16x32xbf16> to vector<16x32xf32>
    %128 = arith.truncf %123 : vector<16x32xf32> to vector<16x32xbf16>
    %cst_84 = arith.constant dense<0.000000e+00> : vector<16x32xf32>
    %129 = tpu.matmul %128, %0, %cst_84 {dimension_numbers = #tpu.dot_dimension_numbers<[1], [0], [0], [1], [0, 0, 1, 1], [], []>} : vector<16x32xbf16>, vector<32x32xbf16>, vector<16x32xf32> -> vector<16x32xf32>
    %130 = arith.addf %129, %3 : vector<16x32xf32>
    %cst_85 = arith.constant 0.000000e+00 : f32
    %131 = vector.broadcast %cst_85 : f32 to vector<16x32xf32>
    %132 = arith.maximumf %130, %131 : vector<16x32xf32>
    %133 = arith.addf %132, %127 : vector<16x32xf32>
    %134 = arith.index_cast %c8_i32 : i32 to index
    %c0_86 = arith.constant 0 : index
    %c0_87 = arith.constant 0 : index
    %135 = vector.load %arg4[%134, %c0_86, %c0_87] : memref<16x16x32xf32, #tpu.memory_space<vmem>>, vector<1x16x32xf32>
    %136 = vector.shape_cast %135 : vector<1x16x32xf32> to vector<16x32xf32>
    %137 = vector.shape_cast %133 : vector<16x32xf32> to vector<1x16x32xf32>
    tpu.vector_store %arg4[%134, %c0_86, %c0_87], %137 {strides = array<i32>} : memref<16x16x32xf32, #tpu.memory_space<vmem>>, vector<1x16x32xf32>,
    %c0_88 = arith.constant 0 : index
    %c0_89 = arith.constant 0 : index
    %138 = vector.load %arg5[%c0_88, %c0_89] : memref<16x32xf32, #tpu.memory_space<vmem>>, vector<16x32xf32>
    tpu.vector_store %arg5[%c0_88, %c0_89], %133 {strides = array<i32>} : memref<16x32xf32, #tpu.memory_space<vmem>>, vector<16x32xf32>,
    %c9_i32 = arith.constant 9 : i32
    %c0_90 = arith.constant 0 : index
    %c0_91 = arith.constant 0 : index
    %139 = vector.load %arg5[%c0_90, %c0_91] : memref<16x32xf32, #tpu.memory_space<vmem>>, vector<16x32xf32>
    %140 = arith.index_cast %c9_i32 : i32 to index
    %c0_92 = arith.constant 0 : index
    %c0_93 = arith.constant 0 : index
    %141 = vector.load %arg3[%140, %c0_92, %c0_93] : memref<16x16x32xbf16, #tpu.memory_space<vmem>>, vector<1x16x32xbf16>
    %142 = vector.shape_cast %141 : vector<1x16x32xbf16> to vector<16x32xbf16>
    %143 = arith.extf %142 : vector<16x32xbf16> to vector<16x32xf32>
    %144 = arith.truncf %139 : vector<16x32xf32> to vector<16x32xbf16>
    %cst_94 = arith.constant dense<0.000000e+00> : vector<16x32xf32>
    %145 = tpu.matmul %144, %0, %cst_94 {dimension_numbers = #tpu.dot_dimension_numbers<[1], [0], [0], [1], [0, 0, 1, 1], [], []>} : vector<16x32xbf16>, vector<32x32xbf16>, vector<16x32xf32> -> vector<16x32xf32>
    %146 = arith.addf %145, %3 : vector<16x32xf32>
    %cst_95 = arith.constant 0.000000e+00 : f32
    %147 = vector.broadcast %cst_95 : f32 to vector<16x32xf32>
    %148 = arith.maximumf %146, %147 : vector<16x32xf32>
    %149 = arith.addf %148, %143 : vector<16x32xf32>
    %150 = arith.index_cast %c9_i32 : i32 to index
    %c0_96 = arith.constant 0 : index
    %c0_97 = arith.constant 0 : index
    %151 = vector.load %arg4[%150, %c0_96, %c0_97] : memref<16x16x32xf32, #tpu.memory_space<vmem>>, vector<1x16x32xf32>
    %152 = vector.shape_cast %151 : vector<1x16x32xf32> to vector<16x32xf32>
    %153 = vector.shape_cast %149 : vector<16x32xf32> to vector<1x16x32xf32>
    tpu.vector_store %arg4[%150, %c0_96, %c0_97], %153 {strides = array<i32>} : memref<16x16x32xf32, #tpu.memory_space<vmem>>, vector<1x16x32xf32>,
    %c0_98 = arith.constant 0 : index
    %c0_99 = arith.constant 0 : index
    %154 = vector.load %arg5[%c0_98, %c0_99] : memref<16x32xf32, #tpu.memory_space<vmem>>, vector<16x32xf32>
    tpu.vector_store %arg5[%c0_98, %c0_99], %149 {strides = array<i32>} : memref<16x32xf32, #tpu.memory_space<vmem>>, vector<16x32xf32>,
    %c10_i32 = arith.constant 10 : i32
    %c0_100 = arith.constant 0 : index
    %c0_101 = arith.constant 0 : index
    %155 = vector.load %arg5[%c0_100, %c0_101] : memref<16x32xf32, #tpu.memory_space<vmem>>, vector<16x32xf32>
    %156 = arith.index_cast %c10_i32 : i32 to index
    %c0_102 = arith.constant 0 : index
    %c0_103 = arith.constant 0 : index
    %157 = vector.load %arg3[%156, %c0_102, %c0_103] : memref<16x16x32xbf16, #tpu.memory_space<vmem>>, vector<1x16x32xbf16>
    %158 = vector.shape_cast %157 : vector<1x16x32xbf16> to vector<16x32xbf16>
    %159 = arith.extf %158 : vector<16x32xbf16> to vector<16x32xf32>
    %160 = arith.truncf %155 : vector<16x32xf32> to vector<16x32xbf16>
    %cst_104 = arith.constant dense<0.000000e+00> : vector<16x32xf32>
    %161 = tpu.matmul %160, %0, %cst_104 {dimension_numbers = #tpu.dot_dimension_numbers<[1], [0], [0], [1], [0, 0, 1, 1], [], []>} : vector<16x32xbf16>, vector<32x32xbf16>, vector<16x32xf32> -> vector<16x32xf32>
    %162 = arith.addf %161, %3 : vector<16x32xf32>
    %cst_105 = arith.constant 0.000000e+00 : f32
    %163 = vector.broadcast %cst_105 : f32 to vector<16x32xf32>
    %164 = arith.maximumf %162, %163 : vector<16x32xf32>
    %165 = arith.addf %164, %159 : vector<16x32xf32>
    %166 = arith.index_cast %c10_i32 : i32 to index
    %c0_106 = arith.constant 0 : index
    %c0_107 = arith.constant 0 : index
    %167 = vector.load %arg4[%166, %c0_106, %c0_107] : memref<16x16x32xf32, #tpu.memory_space<vmem>>, vector<1x16x32xf32>
    %168 = vector.shape_cast %167 : vector<1x16x32xf32> to vector<16x32xf32>
    %169 = vector.shape_cast %165 : vector<16x32xf32> to vector<1x16x32xf32>
    tpu.vector_store %arg4[%166, %c0_106, %c0_107], %169 {strides = array<i32>} : memref<16x16x32xf32, #tpu.memory_space<vmem>>, vector<1x16x32xf32>,
    %c0_108 = arith.constant 0 : index
    %c0_109 = arith.constant 0 : index
    %170 = vector.load %arg5[%c0_108, %c0_109] : memref<16x32xf32, #tpu.memory_space<vmem>>, vector<16x32xf32>
    tpu.vector_store %arg5[%c0_108, %c0_109], %165 {strides = array<i32>} : memref<16x32xf32, #tpu.memory_space<vmem>>, vector<16x32xf32>,
    %c11_i32 = arith.constant 11 : i32
    %c0_110 = arith.constant 0 : index
    %c0_111 = arith.constant 0 : index
    %171 = vector.load %arg5[%c0_110, %c0_111] : memref<16x32xf32, #tpu.memory_space<vmem>>, vector<16x32xf32>
    %172 = arith.index_cast %c11_i32 : i32 to index
    %c0_112 = arith.constant 0 : index
    %c0_113 = arith.constant 0 : index
    %173 = vector.load %arg3[%172, %c0_112, %c0_113] : memref<16x16x32xbf16, #tpu.memory_space<vmem>>, vector<1x16x32xbf16>
    %174 = vector.shape_cast %173 : vector<1x16x32xbf16> to vector<16x32xbf16>
    %175 = arith.extf %174 : vector<16x32xbf16> to vector<16x32xf32>
    %176 = arith.truncf %171 : vector<16x32xf32> to vector<16x32xbf16>
    %cst_114 = arith.constant dense<0.000000e+00> : vector<16x32xf32>
    %177 = tpu.matmul %176, %0, %cst_114 {dimension_numbers = #tpu.dot_dimension_numbers<[1], [0], [0], [1], [0, 0, 1, 1], [], []>} : vector<16x32xbf16>, vector<32x32xbf16>, vector<16x32xf32> -> vector<16x32xf32>
    %178 = arith.addf %177, %3 : vector<16x32xf32>
    %cst_115 = arith.constant 0.000000e+00 : f32
    %179 = vector.broadcast %cst_115 : f32 to vector<16x32xf32>
    %180 = arith.maximumf %178, %179 : vector<16x32xf32>
    %181 = arith.addf %180, %175 : vector<16x32xf32>
    %182 = arith.index_cast %c11_i32 : i32 to index
    %c0_116 = arith.constant 0 : index
    %c0_117 = arith.constant 0 : index
    %183 = vector.load %arg4[%182, %c0_116, %c0_117] : memref<16x16x32xf32, #tpu.memory_space<vmem>>, vector<1x16x32xf32>
    %184 = vector.shape_cast %183 : vector<1x16x32xf32> to vector<16x32xf32>
    %185 = vector.shape_cast %181 : vector<16x32xf32> to vector<1x16x32xf32>
    tpu.vector_store %arg4[%182, %c0_116, %c0_117], %185 {strides = array<i32>} : memref<16x16x32xf32, #tpu.memory_space<vmem>>, vector<1x16x32xf32>,
    %c0_118 = arith.constant 0 : index
    %c0_119 = arith.constant 0 : index
    %186 = vector.load %arg5[%c0_118, %c0_119] : memref<16x32xf32, #tpu.memory_space<vmem>>, vector<16x32xf32>
    tpu.vector_store %arg5[%c0_118, %c0_119], %181 {strides = array<i32>} : memref<16x32xf32, #tpu.memory_space<vmem>>, vector<16x32xf32>,
    %c12_i32 = arith.constant 12 : i32
    %c0_120 = arith.constant 0 : index
    %c0_121 = arith.constant 0 : index
    %187 = vector.load %arg5[%c0_120, %c0_121] : memref<16x32xf32, #tpu.memory_space<vmem>>, vector<16x32xf32>
    %188 = arith.index_cast %c12_i32 : i32 to index
    %c0_122 = arith.constant 0 : index
    %c0_123 = arith.constant 0 : index
    %189 = vector.load %arg3[%188, %c0_122, %c0_123] : memref<16x16x32xbf16, #tpu.memory_space<vmem>>, vector<1x16x32xbf16>
    %190 = vector.shape_cast %189 : vector<1x16x32xbf16> to vector<16x32xbf16>
    %191 = arith.extf %190 : vector<16x32xbf16> to vector<16x32xf32>
    %192 = arith.truncf %187 : vector<16x32xf32> to vector<16x32xbf16>
    %cst_124 = arith.constant dense<0.000000e+00> : vector<16x32xf32>
    %193 = tpu.matmul %192, %0, %cst_124 {dimension_numbers = #tpu.dot_dimension_numbers<[1], [0], [0], [1], [0, 0, 1, 1], [], []>} : vector<16x32xbf16>, vector<32x32xbf16>, vector<16x32xf32> -> vector<16x32xf32>
    %194 = arith.addf %193, %3 : vector<16x32xf32>
    %cst_125 = arith.constant 0.000000e+00 : f32
    %195 = vector.broadcast %cst_125 : f32 to vector<16x32xf32>
    %196 = arith.maximumf %194, %195 : vector<16x32xf32>
    %197 = arith.addf %196, %191 : vector<16x32xf32>
    %198 = arith.index_cast %c12_i32 : i32 to index
    %c0_126 = arith.constant 0 : index
    %c0_127 = arith.constant 0 : index
    %199 = vector.load %arg4[%198, %c0_126, %c0_127] : memref<16x16x32xf32, #tpu.memory_space<vmem>>, vector<1x16x32xf32>
    %200 = vector.shape_cast %199 : vector<1x16x32xf32> to vector<16x32xf32>
    %201 = vector.shape_cast %197 : vector<16x32xf32> to vector<1x16x32xf32>
    tpu.vector_store %arg4[%198, %c0_126, %c0_127], %201 {strides = array<i32>} : memref<16x16x32xf32, #tpu.memory_space<vmem>>, vector<1x16x32xf32>,
    %c0_128 = arith.constant 0 : index
    %c0_129 = arith.constant 0 : index
    %202 = vector.load %arg5[%c0_128, %c0_129] : memref<16x32xf32, #tpu.memory_space<vmem>>, vector<16x32xf32>
    tpu.vector_store %arg5[%c0_128, %c0_129], %197 {strides = array<i32>} : memref<16x32xf32, #tpu.memory_space<vmem>>, vector<16x32xf32>,
    %c13_i32 = arith.constant 13 : i32
    %c0_130 = arith.constant 0 : index
    %c0_131 = arith.constant 0 : index
    %203 = vector.load %arg5[%c0_130, %c0_131] : memref<16x32xf32, #tpu.memory_space<vmem>>, vector<16x32xf32>
    %204 = arith.index_cast %c13_i32 : i32 to index
    %c0_132 = arith.constant 0 : index
    %c0_133 = arith.constant 0 : index
    %205 = vector.load %arg3[%204, %c0_132, %c0_133] : memref<16x16x32xbf16, #tpu.memory_space<vmem>>, vector<1x16x32xbf16>
    %206 = vector.shape_cast %205 : vector<1x16x32xbf16> to vector<16x32xbf16>
    %207 = arith.extf %206 : vector<16x32xbf16> to vector<16x32xf32>
    %208 = arith.truncf %203 : vector<16x32xf32> to vector<16x32xbf16>
    %cst_134 = arith.constant dense<0.000000e+00> : vector<16x32xf32>
    %209 = tpu.matmul %208, %0, %cst_134 {dimension_numbers = #tpu.dot_dimension_numbers<[1], [0], [0], [1], [0, 0, 1, 1], [], []>} : vector<16x32xbf16>, vector<32x32xbf16>, vector<16x32xf32> -> vector<16x32xf32>
    %210 = arith.addf %209, %3 : vector<16x32xf32>
    %cst_135 = arith.constant 0.000000e+00 : f32
    %211 = vector.broadcast %cst_135 : f32 to vector<16x32xf32>
    %212 = arith.maximumf %210, %211 : vector<16x32xf32>
    %213 = arith.addf %212, %207 : vector<16x32xf32>
    %214 = arith.index_cast %c13_i32 : i32 to index
    %c0_136 = arith.constant 0 : index
    %c0_137 = arith.constant 0 : index
    %215 = vector.load %arg4[%214, %c0_136, %c0_137] : memref<16x16x32xf32, #tpu.memory_space<vmem>>, vector<1x16x32xf32>
    %216 = vector.shape_cast %215 : vector<1x16x32xf32> to vector<16x32xf32>
    %217 = vector.shape_cast %213 : vector<16x32xf32> to vector<1x16x32xf32>
    tpu.vector_store %arg4[%214, %c0_136, %c0_137], %217 {strides = array<i32>} : memref<16x16x32xf32, #tpu.memory_space<vmem>>, vector<1x16x32xf32>,
    %c0_138 = arith.constant 0 : index
    %c0_139 = arith.constant 0 : index
    %218 = vector.load %arg5[%c0_138, %c0_139] : memref<16x32xf32, #tpu.memory_space<vmem>>, vector<16x32xf32>
    tpu.vector_store %arg5[%c0_138, %c0_139], %213 {strides = array<i32>} : memref<16x32xf32, #tpu.memory_space<vmem>>, vector<16x32xf32>,
    %c14_i32 = arith.constant 14 : i32
    %c0_140 = arith.constant 0 : index
    %c0_141 = arith.constant 0 : index
    %219 = vector.load %arg5[%c0_140, %c0_141] : memref<16x32xf32, #tpu.memory_space<vmem>>, vector<16x32xf32>
    %220 = arith.index_cast %c14_i32 : i32 to index
    %c0_142 = arith.constant 0 : index
    %c0_143 = arith.constant 0 : index
    %221 = vector.load %arg3[%220, %c0_142, %c0_143] : memref<16x16x32xbf16, #tpu.memory_space<vmem>>, vector<1x16x32xbf16>
    %222 = vector.shape_cast %221 : vector<1x16x32xbf16> to vector<16x32xbf16>
    %223 = arith.extf %222 : vector<16x32xbf16> to vector<16x32xf32>
    %224 = arith.truncf %219 : vector<16x32xf32> to vector<16x32xbf16>
    %cst_144 = arith.constant dense<0.000000e+00> : vector<16x32xf32>
    %225 = tpu.matmul %224, %0, %cst_144 {dimension_numbers = #tpu.dot_dimension_numbers<[1], [0], [0], [1], [0, 0, 1, 1], [], []>} : vector<16x32xbf16>, vector<32x32xbf16>, vector<16x32xf32> -> vector<16x32xf32>
    %226 = arith.addf %225, %3 : vector<16x32xf32>
    %cst_145 = arith.constant 0.000000e+00 : f32
    %227 = vector.broadcast %cst_145 : f32 to vector<16x32xf32>
    %228 = arith.maximumf %226, %227 : vector<16x32xf32>
    %229 = arith.addf %228, %223 : vector<16x32xf32>
    %230 = arith.index_cast %c14_i32 : i32 to index
    %c0_146 = arith.constant 0 : index
    %c0_147 = arith.constant 0 : index
    %231 = vector.load %arg4[%230, %c0_146, %c0_147] : memref<16x16x32xf32, #tpu.memory_space<vmem>>, vector<1x16x32xf32>
    %232 = vector.shape_cast %231 : vector<1x16x32xf32> to vector<16x32xf32>
    %233 = vector.shape_cast %229 : vector<16x32xf32> to vector<1x16x32xf32>
    tpu.vector_store %arg4[%230, %c0_146, %c0_147], %233 {strides = array<i32>} : memref<16x16x32xf32, #tpu.memory_space<vmem>>, vector<1x16x32xf32>,
    %c0_148 = arith.constant 0 : index
    %c0_149 = arith.constant 0 : index
    %234 = vector.load %arg5[%c0_148, %c0_149] : memref<16x32xf32, #tpu.memory_space<vmem>>, vector<16x32xf32>
    tpu.vector_store %arg5[%c0_148, %c0_149], %229 {strides = array<i32>} : memref<16x32xf32, #tpu.memory_space<vmem>>, vector<16x32xf32>,
    %c15_i32 = arith.constant 15 : i32
    %c0_150 = arith.constant 0 : index
    %c0_151 = arith.constant 0 : index
    %235 = vector.load %arg5[%c0_150, %c0_151] : memref<16x32xf32, #tpu.memory_space<vmem>>, vector<16x32xf32>
    %236 = arith.index_cast %c15_i32 : i32 to index
    %c0_152 = arith.constant 0 : index
    %c0_153 = arith.constant 0 : index
    %237 = vector.load %arg3[%236, %c0_152, %c0_153] : memref<16x16x32xbf16, #tpu.memory_space<vmem>>, vector<1x16x32xbf16>
    %238 = vector.shape_cast %237 : vector<1x16x32xbf16> to vector<16x32xbf16>
    %239 = arith.extf %238 : vector<16x32xbf16> to vector<16x32xf32>
    %240 = arith.truncf %235 : vector<16x32xf32> to vector<16x32xbf16>
    %cst_154 = arith.constant dense<0.000000e+00> : vector<16x32xf32>
    %241 = tpu.matmul %240, %0, %cst_154 {dimension_numbers = #tpu.dot_dimension_numbers<[1], [0], [0], [1], [0, 0, 1, 1], [], []>} : vector<16x32xbf16>, vector<32x32xbf16>, vector<16x32xf32> -> vector<16x32xf32>
    %242 = arith.addf %241, %3 : vector<16x32xf32>
    %cst_155 = arith.constant 0.000000e+00 : f32
    %243 = vector.broadcast %cst_155 : f32 to vector<16x32xf32>
    %244 = arith.maximumf %242, %243 : vector<16x32xf32>
    %245 = arith.addf %244, %239 : vector<16x32xf32>
    %246 = arith.index_cast %c15_i32 : i32 to index
    %c0_156 = arith.constant 0 : index
    %c0_157 = arith.constant 0 : index
    %247 = vector.load %arg4[%246, %c0_156, %c0_157] : memref<16x16x32xf32, #tpu.memory_space<vmem>>, vector<1x16x32xf32>
    %248 = vector.shape_cast %247 : vector<1x16x32xf32> to vector<16x32xf32>
    %249 = vector.shape_cast %245 : vector<16x32xf32> to vector<1x16x32xf32>
    tpu.vector_store %arg4[%246, %c0_156, %c0_157], %249 {strides = array<i32>} : memref<16x16x32xf32, #tpu.memory_space<vmem>>, vector<1x16x32xf32>,
    %c0_158 = arith.constant 0 : index
    %c0_159 = arith.constant 0 : index
    %250 = vector.load %arg5[%c0_158, %c0_159] : memref<16x32xf32, #tpu.memory_space<vmem>>, vector<16x32xf32>
    tpu.vector_store %arg5[%c0_158, %c0_159], %245 {strides = array<i32>} : memref<16x32xf32, #tpu.memory_space<vmem>>, vector<16x32xf32>,
    %c15_i32_160 = arith.constant 15 : i32
    %c0_i32 = arith.constant 0 : i32
    %c14_i32_161 = arith.constant 14 : i32
    %251 = arith.subi %c14_i32_161, %c0_i32 : i32
    %c0_162 = arith.constant 0 : index
    %c0_163 = arith.constant 0 : index
    %252 = vector.load %arg5[%c0_162, %c0_163] : memref<16x32xf32, #tpu.memory_space<vmem>>, vector<16x32xf32>
    %253 = arith.index_cast %251 : i32 to index
    %c0_164 = arith.constant 0 : index
    %c0_165 = arith.constant 0 : index
    %254 = vector.load %arg4[%253, %c0_164, %c0_165] : memref<16x16x32xf32, #tpu.memory_space<vmem>>, vector<1x16x32xf32>
    %255 = vector.shape_cast %254 : vector<1x16x32xf32> to vector<16x32xf32>
    %256 = arith.truncf %252 : vector<16x32xf32> to vector<16x32xbf16>
    %cst_166 = arith.constant dense<0.000000e+00> : vector<16x32xf32>
    %257 = tpu.matmul %256, %0, %cst_166 {dimension_numbers = #tpu.dot_dimension_numbers<[1], [0], [0], [1], [0, 0, 1, 1], [], []>} : vector<16x32xbf16>, vector<32x32xbf16>, vector<16x32xf32> -> vector<16x32xf32>
    %258 = arith.addf %257, %3 : vector<16x32xf32>
    %cst_167 = arith.constant 0.000000e+00 : f32
    %259 = vector.broadcast %cst_167 : f32 to vector<16x32xf32>
    %260 = arith.maximumf %258, %259 : vector<16x32xf32>
    %261 = arith.addf %260, %255 : vector<16x32xf32>
    %262 = arith.index_cast %251 : i32 to index
    %c0_168 = arith.constant 0 : index
    %c0_169 = arith.constant 0 : index
    %263 = vector.load %arg4[%262, %c0_168, %c0_169] : memref<16x16x32xf32, #tpu.memory_space<vmem>>, vector<1x16x32xf32>
    %264 = vector.shape_cast %263 : vector<1x16x32xf32> to vector<16x32xf32>
    %265 = vector.shape_cast %261 : vector<16x32xf32> to vector<1x16x32xf32>
    tpu.vector_store %arg4[%262, %c0_168, %c0_169], %265 {strides = array<i32>} : memref<16x16x32xf32, #tpu.memory_space<vmem>>, vector<1x16x32xf32>,
    %c0_170 = arith.constant 0 : index
    %c0_171 = arith.constant 0 : index
    %266 = vector.load %arg5[%c0_170, %c0_171] : memref<16x32xf32, #tpu.memory_space<vmem>>, vector<16x32xf32>
    tpu.vector_store %arg5[%c0_170, %c0_171], %261 {strides = array<i32>} : memref<16x32xf32, #tpu.memory_space<vmem>>, vector<16x32xf32>,
    %c1_i32_172 = arith.constant 1 : i32
    %c14_i32_173 = arith.constant 14 : i32
    %267 = arith.subi %c14_i32_173, %c1_i32_172 : i32
    %c0_174 = arith.constant 0 : index
    %c0_175 = arith.constant 0 : index
    %268 = vector.load %arg5[%c0_174, %c0_175] : memref<16x32xf32, #tpu.memory_space<vmem>>, vector<16x32xf32>
    %269 = arith.index_cast %267 : i32 to index
    %c0_176 = arith.constant 0 : index
    %c0_177 = arith.constant 0 : index
    %270 = vector.load %arg4[%269, %c0_176, %c0_177] : memref<16x16x32xf32, #tpu.memory_space<vmem>>, vector<1x16x32xf32>
    %271 = vector.shape_cast %270 : vector<1x16x32xf32> to vector<16x32xf32>
    %272 = arith.truncf %268 : vector<16x32xf32> to vector<16x32xbf16>
    %cst_178 = arith.constant dense<0.000000e+00> : vector<16x32xf32>
    %273 = tpu.matmul %272, %0, %cst_178 {dimension_numbers = #tpu.dot_dimension_numbers<[1], [0], [0], [1], [0, 0, 1, 1], [], []>} : vector<16x32xbf16>, vector<32x32xbf16>, vector<16x32xf32> -> vector<16x32xf32>
    %274 = arith.addf %273, %3 : vector<16x32xf32>
    %cst_179 = arith.constant 0.000000e+00 : f32
    %275 = vector.broadcast %cst_179 : f32 to vector<16x32xf32>
    %276 = arith.maximumf %274, %275 : vector<16x32xf32>
    %277 = arith.addf %276, %271 : vector<16x32xf32>
    %278 = arith.index_cast %267 : i32 to index
    %c0_180 = arith.constant 0 : index
    %c0_181 = arith.constant 0 : index
    %279 = vector.load %arg4[%278, %c0_180, %c0_181] : memref<16x16x32xf32, #tpu.memory_space<vmem>>, vector<1x16x32xf32>
    %280 = vector.shape_cast %279 : vector<1x16x32xf32> to vector<16x32xf32>
    %281 = vector.shape_cast %277 : vector<16x32xf32> to vector<1x16x32xf32>
    tpu.vector_store %arg4[%278, %c0_180, %c0_181], %281 {strides = array<i32>} : memref<16x16x32xf32, #tpu.memory_space<vmem>>, vector<1x16x32xf32>,
    %c0_182 = arith.constant 0 : index
    %c0_183 = arith.constant 0 : index
    %282 = vector.load %arg5[%c0_182, %c0_183] : memref<16x32xf32, #tpu.memory_space<vmem>>, vector<16x32xf32>
    tpu.vector_store %arg5[%c0_182, %c0_183], %277 {strides = array<i32>} : memref<16x32xf32, #tpu.memory_space<vmem>>, vector<16x32xf32>,
    %c2_i32_184 = arith.constant 2 : i32
    %c14_i32_185 = arith.constant 14 : i32
    %283 = arith.subi %c14_i32_185, %c2_i32_184 : i32
    %c0_186 = arith.constant 0 : index
    %c0_187 = arith.constant 0 : index
    %284 = vector.load %arg5[%c0_186, %c0_187] : memref<16x32xf32, #tpu.memory_space<vmem>>, vector<16x32xf32>
    %285 = arith.index_cast %283 : i32 to index
    %c0_188 = arith.constant 0 : index
    %c0_189 = arith.constant 0 : index
    %286 = vector.load %arg4[%285, %c0_188, %c0_189] : memref<16x16x32xf32, #tpu.memory_space<vmem>>, vector<1x16x32xf32>
    %287 = vector.shape_cast %286 : vector<1x16x32xf32> to vector<16x32xf32>
    %288 = arith.truncf %284 : vector<16x32xf32> to vector<16x32xbf16>
    %cst_190 = arith.constant dense<0.000000e+00> : vector<16x32xf32>
    %289 = tpu.matmul %288, %0, %cst_190 {dimension_numbers = #tpu.dot_dimension_numbers<[1], [0], [0], [1], [0, 0, 1, 1], [], []>} : vector<16x32xbf16>, vector<32x32xbf16>, vector<16x32xf32> -> vector<16x32xf32>
    %290 = arith.addf %289, %3 : vector<16x32xf32>
    %cst_191 = arith.constant 0.000000e+00 : f32
    %291 = vector.broadcast %cst_191 : f32 to vector<16x32xf32>
    %292 = arith.maximumf %290, %291 : vector<16x32xf32>
    %293 = arith.addf %292, %287 : vector<16x32xf32>
    %294 = arith.index_cast %283 : i32 to index
    %c0_192 = arith.constant 0 : index
    %c0_193 = arith.constant 0 : index
    %295 = vector.load %arg4[%294, %c0_192, %c0_193] : memref<16x16x32xf32, #tpu.memory_space<vmem>>, vector<1x16x32xf32>
    %296 = vector.shape_cast %295 : vector<1x16x32xf32> to vector<16x32xf32>
    %297 = vector.shape_cast %293 : vector<16x32xf32> to vector<1x16x32xf32>
    tpu.vector_store %arg4[%294, %c0_192, %c0_193], %297 {strides = array<i32>} : memref<16x16x32xf32, #tpu.memory_space<vmem>>, vector<1x16x32xf32>,
    %c0_194 = arith.constant 0 : index
    %c0_195 = arith.constant 0 : index
    %298 = vector.load %arg5[%c0_194, %c0_195] : memref<16x32xf32, #tpu.memory_space<vmem>>, vector<16x32xf32>
    tpu.vector_store %arg5[%c0_194, %c0_195], %293 {strides = array<i32>} : memref<16x32xf32, #tpu.memory_space<vmem>>, vector<16x32xf32>,
    %c3_i32_196 = arith.constant 3 : i32
    %c14_i32_197 = arith.constant 14 : i32
    %299 = arith.subi %c14_i32_197, %c3_i32_196 : i32
    %c0_198 = arith.constant 0 : index
    %c0_199 = arith.constant 0 : index
    %300 = vector.load %arg5[%c0_198, %c0_199] : memref<16x32xf32, #tpu.memory_space<vmem>>, vector<16x32xf32>
    %301 = arith.index_cast %299 : i32 to index
    %c0_200 = arith.constant 0 : index
    %c0_201 = arith.constant 0 : index
    %302 = vector.load %arg4[%301, %c0_200, %c0_201] : memref<16x16x32xf32, #tpu.memory_space<vmem>>, vector<1x16x32xf32>
    %303 = vector.shape_cast %302 : vector<1x16x32xf32> to vector<16x32xf32>
    %304 = arith.truncf %300 : vector<16x32xf32> to vector<16x32xbf16>
    %cst_202 = arith.constant dense<0.000000e+00> : vector<16x32xf32>
    %305 = tpu.matmul %304, %0, %cst_202 {dimension_numbers = #tpu.dot_dimension_numbers<[1], [0], [0], [1], [0, 0, 1, 1], [], []>} : vector<16x32xbf16>, vector<32x32xbf16>, vector<16x32xf32> -> vector<16x32xf32>
    %306 = arith.addf %305, %3 : vector<16x32xf32>
    %cst_203 = arith.constant 0.000000e+00 : f32
    %307 = vector.broadcast %cst_203 : f32 to vector<16x32xf32>
    %308 = arith.maximumf %306, %307 : vector<16x32xf32>
    %309 = arith.addf %308, %303 : vector<16x32xf32>
    %310 = arith.index_cast %299 : i32 to index
    %c0_204 = arith.constant 0 : index
    %c0_205 = arith.constant 0 : index
    %311 = vector.load %arg4[%310, %c0_204, %c0_205] : memref<16x16x32xf32, #tpu.memory_space<vmem>>, vector<1x16x32xf32>
    %312 = vector.shape_cast %311 : vector<1x16x32xf32> to vector<16x32xf32>
    %313 = vector.shape_cast %309 : vector<16x32xf32> to vector<1x16x32xf32>
    tpu.vector_store %arg4[%310, %c0_204, %c0_205], %313 {strides = array<i32>} : memref<16x16x32xf32, #tpu.memory_space<vmem>>, vector<1x16x32xf32>,
    %c0_206 = arith.constant 0 : index
    %c0_207 = arith.constant 0 : index
    %314 = vector.load %arg5[%c0_206, %c0_207] : memref<16x32xf32, #tpu.memory_space<vmem>>, vector<16x32xf32>
    tpu.vector_store %arg5[%c0_206, %c0_207], %309 {strides = array<i32>} : memref<16x32xf32, #tpu.memory_space<vmem>>, vector<16x32xf32>,
    %c4_i32_208 = arith.constant 4 : i32
    %c14_i32_209 = arith.constant 14 : i32
    %315 = arith.subi %c14_i32_209, %c4_i32_208 : i32
    %c0_210 = arith.constant 0 : index
    %c0_211 = arith.constant 0 : index
    %316 = vector.load %arg5[%c0_210, %c0_211] : memref<16x32xf32, #tpu.memory_space<vmem>>, vector<16x32xf32>
    %317 = arith.index_cast %315 : i32 to index
    %c0_212 = arith.constant 0 : index
    %c0_213 = arith.constant 0 : index
    %318 = vector.load %arg4[%317, %c0_212, %c0_213] : memref<16x16x32xf32, #tpu.memory_space<vmem>>, vector<1x16x32xf32>
    %319 = vector.shape_cast %318 : vector<1x16x32xf32> to vector<16x32xf32>
    %320 = arith.truncf %316 : vector<16x32xf32> to vector<16x32xbf16>
    %cst_214 = arith.constant dense<0.000000e+00> : vector<16x32xf32>
    %321 = tpu.matmul %320, %0, %cst_214 {dimension_numbers = #tpu.dot_dimension_numbers<[1], [0], [0], [1], [0, 0, 1, 1], [], []>} : vector<16x32xbf16>, vector<32x32xbf16>, vector<16x32xf32> -> vector<16x32xf32>
    %322 = arith.addf %321, %3 : vector<16x32xf32>
    %cst_215 = arith.constant 0.000000e+00 : f32
    %323 = vector.broadcast %cst_215 : f32 to vector<16x32xf32>
    %324 = arith.maximumf %322, %323 : vector<16x32xf32>
    %325 = arith.addf %324, %319 : vector<16x32xf32>
    %326 = arith.index_cast %315 : i32 to index
    %c0_216 = arith.constant 0 : index
    %c0_217 = arith.constant 0 : index
    %327 = vector.load %arg4[%326, %c0_216, %c0_217] : memref<16x16x32xf32, #tpu.memory_space<vmem>>, vector<1x16x32xf32>
    %328 = vector.shape_cast %327 : vector<1x16x32xf32> to vector<16x32xf32>
    %329 = vector.shape_cast %325 : vector<16x32xf32> to vector<1x16x32xf32>
    tpu.vector_store %arg4[%326, %c0_216, %c0_217], %329 {strides = array<i32>} : memref<16x16x32xf32, #tpu.memory_space<vmem>>, vector<1x16x32xf32>,
    %c0_218 = arith.constant 0 : index
    %c0_219 = arith.constant 0 : index
    %330 = vector.load %arg5[%c0_218, %c0_219] : memref<16x32xf32, #tpu.memory_space<vmem>>, vector<16x32xf32>
    tpu.vector_store %arg5[%c0_218, %c0_219], %325 {strides = array<i32>} : memref<16x32xf32, #tpu.memory_space<vmem>>, vector<16x32xf32>,
    %c5_i32_220 = arith.constant 5 : i32
    %c14_i32_221 = arith.constant 14 : i32
    %331 = arith.subi %c14_i32_221, %c5_i32_220 : i32
    %c0_222 = arith.constant 0 : index
    %c0_223 = arith.constant 0 : index
    %332 = vector.load %arg5[%c0_222, %c0_223] : memref<16x32xf32, #tpu.memory_space<vmem>>, vector<16x32xf32>
    %333 = arith.index_cast %331 : i32 to index
    %c0_224 = arith.constant 0 : index
    %c0_225 = arith.constant 0 : index
    %334 = vector.load %arg4[%333, %c0_224, %c0_225] : memref<16x16x32xf32, #tpu.memory_space<vmem>>, vector<1x16x32xf32>
    %335 = vector.shape_cast %334 : vector<1x16x32xf32> to vector<16x32xf32>
    %336 = arith.truncf %332 : vector<16x32xf32> to vector<16x32xbf16>
    %cst_226 = arith.constant dense<0.000000e+00> : vector<16x32xf32>
    %337 = tpu.matmul %336, %0, %cst_226 {dimension_numbers = #tpu.dot_dimension_numbers<[1], [0], [0], [1], [0, 0, 1, 1], [], []>} : vector<16x32xbf16>, vector<32x32xbf16>, vector<16x32xf32> -> vector<16x32xf32>
    %338 = arith.addf %337, %3 : vector<16x32xf32>
    %cst_227 = arith.constant 0.000000e+00 : f32
    %339 = vector.broadcast %cst_227 : f32 to vector<16x32xf32>
    %340 = arith.maximumf %338, %339 : vector<16x32xf32>
    %341 = arith.addf %340, %335 : vector<16x32xf32>
    %342 = arith.index_cast %331 : i32 to index
    %c0_228 = arith.constant 0 : index
    %c0_229 = arith.constant 0 : index
    %343 = vector.load %arg4[%342, %c0_228, %c0_229] : memref<16x16x32xf32, #tpu.memory_space<vmem>>, vector<1x16x32xf32>
    %344 = vector.shape_cast %343 : vector<1x16x32xf32> to vector<16x32xf32>
    %345 = vector.shape_cast %341 : vector<16x32xf32> to vector<1x16x32xf32>
    tpu.vector_store %arg4[%342, %c0_228, %c0_229], %345 {strides = array<i32>} : memref<16x16x32xf32, #tpu.memory_space<vmem>>, vector<1x16x32xf32>,
    %c0_230 = arith.constant 0 : index
    %c0_231 = arith.constant 0 : index
    %346 = vector.load %arg5[%c0_230, %c0_231] : memref<16x32xf32, #tpu.memory_space<vmem>>, vector<16x32xf32>
    tpu.vector_store %arg5[%c0_230, %c0_231], %341 {strides = array<i32>} : memref<16x32xf32, #tpu.memory_space<vmem>>, vector<16x32xf32>,
    %c6_i32_232 = arith.constant 6 : i32
    %c14_i32_233 = arith.constant 14 : i32
    %347 = arith.subi %c14_i32_233, %c6_i32_232 : i32
    %c0_234 = arith.constant 0 : index
    %c0_235 = arith.constant 0 : index
    %348 = vector.load %arg5[%c0_234, %c0_235] : memref<16x32xf32, #tpu.memory_space<vmem>>, vector<16x32xf32>
    %349 = arith.index_cast %347 : i32 to index
    %c0_236 = arith.constant 0 : index
    %c0_237 = arith.constant 0 : index
    %350 = vector.load %arg4[%349, %c0_236, %c0_237] : memref<16x16x32xf32, #tpu.memory_space<vmem>>, vector<1x16x32xf32>
    %351 = vector.shape_cast %350 : vector<1x16x32xf32> to vector<16x32xf32>
    %352 = arith.truncf %348 : vector<16x32xf32> to vector<16x32xbf16>
    %cst_238 = arith.constant dense<0.000000e+00> : vector<16x32xf32>
    %353 = tpu.matmul %352, %0, %cst_238 {dimension_numbers = #tpu.dot_dimension_numbers<[1], [0], [0], [1], [0, 0, 1, 1], [], []>} : vector<16x32xbf16>, vector<32x32xbf16>, vector<16x32xf32> -> vector<16x32xf32>
    %354 = arith.addf %353, %3 : vector<16x32xf32>
    %cst_239 = arith.constant 0.000000e+00 : f32
    %355 = vector.broadcast %cst_239 : f32 to vector<16x32xf32>
    %356 = arith.maximumf %354, %355 : vector<16x32xf32>
    %357 = arith.addf %356, %351 : vector<16x32xf32>
    %358 = arith.index_cast %347 : i32 to index
    %c0_240 = arith.constant 0 : index
    %c0_241 = arith.constant 0 : index
    %359 = vector.load %arg4[%358, %c0_240, %c0_241] : memref<16x16x32xf32, #tpu.memory_space<vmem>>, vector<1x16x32xf32>
    %360 = vector.shape_cast %359 : vector<1x16x32xf32> to vector<16x32xf32>
    %361 = vector.shape_cast %357 : vector<16x32xf32> to vector<1x16x32xf32>
    tpu.vector_store %arg4[%358, %c0_240, %c0_241], %361 {strides = array<i32>} : memref<16x16x32xf32, #tpu.memory_space<vmem>>, vector<1x16x32xf32>,
    %c0_242 = arith.constant 0 : index
    %c0_243 = arith.constant 0 : index
    %362 = vector.load %arg5[%c0_242, %c0_243] : memref<16x32xf32, #tpu.memory_space<vmem>>, vector<16x32xf32>
    tpu.vector_store %arg5[%c0_242, %c0_243], %357 {strides = array<i32>} : memref<16x32xf32, #tpu.memory_space<vmem>>, vector<16x32xf32>,
    %c7_i32_244 = arith.constant 7 : i32
    %c14_i32_245 = arith.constant 14 : i32
    %363 = arith.subi %c14_i32_245, %c7_i32_244 : i32
    %c0_246 = arith.constant 0 : index
    %c0_247 = arith.constant 0 : index
    %364 = vector.load %arg5[%c0_246, %c0_247] : memref<16x32xf32, #tpu.memory_space<vmem>>, vector<16x32xf32>
    %365 = arith.index_cast %363 : i32 to index
    %c0_248 = arith.constant 0 : index
    %c0_249 = arith.constant 0 : index
    %366 = vector.load %arg4[%365, %c0_248, %c0_249] : memref<16x16x32xf32, #tpu.memory_space<vmem>>, vector<1x16x32xf32>
    %367 = vector.shape_cast %366 : vector<1x16x32xf32> to vector<16x32xf32>
    %368 = arith.truncf %364 : vector<16x32xf32> to vector<16x32xbf16>
    %cst_250 = arith.constant dense<0.000000e+00> : vector<16x32xf32>
    %369 = tpu.matmul %368, %0, %cst_250 {dimension_numbers = #tpu.dot_dimension_numbers<[1], [0], [0], [1], [0, 0, 1, 1], [], []>} : vector<16x32xbf16>, vector<32x32xbf16>, vector<16x32xf32> -> vector<16x32xf32>
    %370 = arith.addf %369, %3 : vector<16x32xf32>
    %cst_251 = arith.constant 0.000000e+00 : f32
    %371 = vector.broadcast %cst_251 : f32 to vector<16x32xf32>
    %372 = arith.maximumf %370, %371 : vector<16x32xf32>
    %373 = arith.addf %372, %367 : vector<16x32xf32>
    %374 = arith.index_cast %363 : i32 to index
    %c0_252 = arith.constant 0 : index
    %c0_253 = arith.constant 0 : index
    %375 = vector.load %arg4[%374, %c0_252, %c0_253] : memref<16x16x32xf32, #tpu.memory_space<vmem>>, vector<1x16x32xf32>
    %376 = vector.shape_cast %375 : vector<1x16x32xf32> to vector<16x32xf32>
    %377 = vector.shape_cast %373 : vector<16x32xf32> to vector<1x16x32xf32>
    tpu.vector_store %arg4[%374, %c0_252, %c0_253], %377 {strides = array<i32>} : memref<16x16x32xf32, #tpu.memory_space<vmem>>, vector<1x16x32xf32>,
    %c0_254 = arith.constant 0 : index
    %c0_255 = arith.constant 0 : index
    %378 = vector.load %arg5[%c0_254, %c0_255] : memref<16x32xf32, #tpu.memory_space<vmem>>, vector<16x32xf32>
    tpu.vector_store %arg5[%c0_254, %c0_255], %373 {strides = array<i32>} : memref<16x32xf32, #tpu.memory_space<vmem>>, vector<16x32xf32>,
    %c8_i32_256 = arith.constant 8 : i32
    %c14_i32_257 = arith.constant 14 : i32
    %379 = arith.subi %c14_i32_257, %c8_i32_256 : i32
    %c0_258 = arith.constant 0 : index
    %c0_259 = arith.constant 0 : index
    %380 = vector.load %arg5[%c0_258, %c0_259] : memref<16x32xf32, #tpu.memory_space<vmem>>, vector<16x32xf32>
    %381 = arith.index_cast %379 : i32 to index
    %c0_260 = arith.constant 0 : index
    %c0_261 = arith.constant 0 : index
    %382 = vector.load %arg4[%381, %c0_260, %c0_261] : memref<16x16x32xf32, #tpu.memory_space<vmem>>, vector<1x16x32xf32>
    %383 = vector.shape_cast %382 : vector<1x16x32xf32> to vector<16x32xf32>
    %384 = arith.truncf %380 : vector<16x32xf32> to vector<16x32xbf16>
    %cst_262 = arith.constant dense<0.000000e+00> : vector<16x32xf32>
    %385 = tpu.matmul %384, %0, %cst_262 {dimension_numbers = #tpu.dot_dimension_numbers<[1], [0], [0], [1], [0, 0, 1, 1], [], []>} : vector<16x32xbf16>, vector<32x32xbf16>, vector<16x32xf32> -> vector<16x32xf32>
    %386 = arith.addf %385, %3 : vector<16x32xf32>
    %cst_263 = arith.constant 0.000000e+00 : f32
    %387 = vector.broadcast %cst_263 : f32 to vector<16x32xf32>
    %388 = arith.maximumf %386, %387 : vector<16x32xf32>
    %389 = arith.addf %388, %383 : vector<16x32xf32>
    %390 = arith.index_cast %379 : i32 to index
    %c0_264 = arith.constant 0 : index
    %c0_265 = arith.constant 0 : index
    %391 = vector.load %arg4[%390, %c0_264, %c0_265] : memref<16x16x32xf32, #tpu.memory_space<vmem>>, vector<1x16x32xf32>
    %392 = vector.shape_cast %391 : vector<1x16x32xf32> to vector<16x32xf32>
    %393 = vector.shape_cast %389 : vector<16x32xf32> to vector<1x16x32xf32>
    tpu.vector_store %arg4[%390, %c0_264, %c0_265], %393 {strides = array<i32>} : memref<16x16x32xf32, #tpu.memory_space<vmem>>, vector<1x16x32xf32>,
    %c0_266 = arith.constant 0 : index
    %c0_267 = arith.constant 0 : index
    %394 = vector.load %arg5[%c0_266, %c0_267] : memref<16x32xf32, #tpu.memory_space<vmem>>, vector<16x32xf32>
    tpu.vector_store %arg5[%c0_266, %c0_267], %389 {strides = array<i32>} : memref<16x32xf32, #tpu.memory_space<vmem>>, vector<16x32xf32>,
    %c9_i32_268 = arith.constant 9 : i32
    %c14_i32_269 = arith.constant 14 : i32
    %395 = arith.subi %c14_i32_269, %c9_i32_268 : i32
    %c0_270 = arith.constant 0 : index
    %c0_271 = arith.constant 0 : index
    %396 = vector.load %arg5[%c0_270, %c0_271] : memref<16x32xf32, #tpu.memory_space<vmem>>, vector<16x32xf32>
    %397 = arith.index_cast %395 : i32 to index
    %c0_272 = arith.constant 0 : index
    %c0_273 = arith.constant 0 : index
    %398 = vector.load %arg4[%397, %c0_272, %c0_273] : memref<16x16x32xf32, #tpu.memory_space<vmem>>, vector<1x16x32xf32>
    %399 = vector.shape_cast %398 : vector<1x16x32xf32> to vector<16x32xf32>
    %400 = arith.truncf %396 : vector<16x32xf32> to vector<16x32xbf16>
    %cst_274 = arith.constant dense<0.000000e+00> : vector<16x32xf32>
    %401 = tpu.matmul %400, %0, %cst_274 {dimension_numbers = #tpu.dot_dimension_numbers<[1], [0], [0], [1], [0, 0, 1, 1], [], []>} : vector<16x32xbf16>, vector<32x32xbf16>, vector<16x32xf32> -> vector<16x32xf32>
    %402 = arith.addf %401, %3 : vector<16x32xf32>
    %cst_275 = arith.constant 0.000000e+00 : f32
    %403 = vector.broadcast %cst_275 : f32 to vector<16x32xf32>
    %404 = arith.maximumf %402, %403 : vector<16x32xf32>
    %405 = arith.addf %404, %399 : vector<16x32xf32>
    %406 = arith.index_cast %395 : i32 to index
    %c0_276 = arith.constant 0 : index
    %c0_277 = arith.constant 0 : index
    %407 = vector.load %arg4[%406, %c0_276, %c0_277] : memref<16x16x32xf32, #tpu.memory_space<vmem>>, vector<1x16x32xf32>
    %408 = vector.shape_cast %407 : vector<1x16x32xf32> to vector<16x32xf32>
    %409 = vector.shape_cast %405 : vector<16x32xf32> to vector<1x16x32xf32>
    tpu.vector_store %arg4[%406, %c0_276, %c0_277], %409 {strides = array<i32>} : memref<16x16x32xf32, #tpu.memory_space<vmem>>, vector<1x16x32xf32>,
    %c0_278 = arith.constant 0 : index
    %c0_279 = arith.constant 0 : index
    %410 = vector.load %arg5[%c0_278, %c0_279] : memref<16x32xf32, #tpu.memory_space<vmem>>, vector<16x32xf32>
    tpu.vector_store %arg5[%c0_278, %c0_279], %405 {strides = array<i32>} : memref<16x32xf32, #tpu.memory_space<vmem>>, vector<16x32xf32>,
    %c10_i32_280 = arith.constant 10 : i32
    %c14_i32_281 = arith.constant 14 : i32
    %411 = arith.subi %c14_i32_281, %c10_i32_280 : i32
    %c0_282 = arith.constant 0 : index
    %c0_283 = arith.constant 0 : index
    %412 = vector.load %arg5[%c0_282, %c0_283] : memref<16x32xf32, #tpu.memory_space<vmem>>, vector<16x32xf32>
    %413 = arith.index_cast %411 : i32 to index
    %c0_284 = arith.constant 0 : index
    %c0_285 = arith.constant 0 : index
    %414 = vector.load %arg4[%413, %c0_284, %c0_285] : memref<16x16x32xf32, #tpu.memory_space<vmem>>, vector<1x16x32xf32>
    %415 = vector.shape_cast %414 : vector<1x16x32xf32> to vector<16x32xf32>
    %416 = arith.truncf %412 : vector<16x32xf32> to vector<16x32xbf16>
    %cst_286 = arith.constant dense<0.000000e+00> : vector<16x32xf32>
    %417 = tpu.matmul %416, %0, %cst_286 {dimension_numbers = #tpu.dot_dimension_numbers<[1], [0], [0], [1], [0, 0, 1, 1], [], []>} : vector<16x32xbf16>, vector<32x32xbf16>, vector<16x32xf32> -> vector<16x32xf32>
    %418 = arith.addf %417, %3 : vector<16x32xf32>
    %cst_287 = arith.constant 0.000000e+00 : f32
    %419 = vector.broadcast %cst_287 : f32 to vector<16x32xf32>
    %420 = arith.maximumf %418, %419 : vector<16x32xf32>
    %421 = arith.addf %420, %415 : vector<16x32xf32>
    %422 = arith.index_cast %411 : i32 to index
    %c0_288 = arith.constant 0 : index
    %c0_289 = arith.constant 0 : index
    %423 = vector.load %arg4[%422, %c0_288, %c0_289] : memref<16x16x32xf32, #tpu.memory_space<vmem>>, vector<1x16x32xf32>
    %424 = vector.shape_cast %423 : vector<1x16x32xf32> to vector<16x32xf32>
    %425 = vector.shape_cast %421 : vector<16x32xf32> to vector<1x16x32xf32>
    tpu.vector_store %arg4[%422, %c0_288, %c0_289], %425 {strides = array<i32>} : memref<16x16x32xf32, #tpu.memory_space<vmem>>, vector<1x16x32xf32>,
    %c0_290 = arith.constant 0 : index
    %c0_291 = arith.constant 0 : index
    %426 = vector.load %arg5[%c0_290, %c0_291] : memref<16x32xf32, #tpu.memory_space<vmem>>, vector<16x32xf32>
    tpu.vector_store %arg5[%c0_290, %c0_291], %421 {strides = array<i32>} : memref<16x32xf32, #tpu.memory_space<vmem>>, vector<16x32xf32>,
    %c11_i32_292 = arith.constant 11 : i32
    %c14_i32_293 = arith.constant 14 : i32
    %427 = arith.subi %c14_i32_293, %c11_i32_292 : i32
    %c0_294 = arith.constant 0 : index
    %c0_295 = arith.constant 0 : index
    %428 = vector.load %arg5[%c0_294, %c0_295] : memref<16x32xf32, #tpu.memory_space<vmem>>, vector<16x32xf32>
    %429 = arith.index_cast %427 : i32 to index
    %c0_296 = arith.constant 0 : index
    %c0_297 = arith.constant 0 : index
    %430 = vector.load %arg4[%429, %c0_296, %c0_297] : memref<16x16x32xf32, #tpu.memory_space<vmem>>, vector<1x16x32xf32>
    %431 = vector.shape_cast %430 : vector<1x16x32xf32> to vector<16x32xf32>
    %432 = arith.truncf %428 : vector<16x32xf32> to vector<16x32xbf16>
    %cst_298 = arith.constant dense<0.000000e+00> : vector<16x32xf32>
    %433 = tpu.matmul %432, %0, %cst_298 {dimension_numbers = #tpu.dot_dimension_numbers<[1], [0], [0], [1], [0, 0, 1, 1], [], []>} : vector<16x32xbf16>, vector<32x32xbf16>, vector<16x32xf32> -> vector<16x32xf32>
    %434 = arith.addf %433, %3 : vector<16x32xf32>
    %cst_299 = arith.constant 0.000000e+00 : f32
    %435 = vector.broadcast %cst_299 : f32 to vector<16x32xf32>
    %436 = arith.maximumf %434, %435 : vector<16x32xf32>
    %437 = arith.addf %436, %431 : vector<16x32xf32>
    %438 = arith.index_cast %427 : i32 to index
    %c0_300 = arith.constant 0 : index
    %c0_301 = arith.constant 0 : index
    %439 = vector.load %arg4[%438, %c0_300, %c0_301] : memref<16x16x32xf32, #tpu.memory_space<vmem>>, vector<1x16x32xf32>
    %440 = vector.shape_cast %439 : vector<1x16x32xf32> to vector<16x32xf32>
    %441 = vector.shape_cast %437 : vector<16x32xf32> to vector<1x16x32xf32>
    tpu.vector_store %arg4[%438, %c0_300, %c0_301], %441 {strides = array<i32>} : memref<16x16x32xf32, #tpu.memory_space<vmem>>, vector<1x16x32xf32>,
    %c0_302 = arith.constant 0 : index
    %c0_303 = arith.constant 0 : index
    %442 = vector.load %arg5[%c0_302, %c0_303] : memref<16x32xf32, #tpu.memory_space<vmem>>, vector<16x32xf32>
    tpu.vector_store %arg5[%c0_302, %c0_303], %437 {strides = array<i32>} : memref<16x32xf32, #tpu.memory_space<vmem>>, vector<16x32xf32>,
    %c12_i32_304 = arith.constant 12 : i32
    %c14_i32_305 = arith.constant 14 : i32
    %443 = arith.subi %c14_i32_305, %c12_i32_304 : i32
    %c0_306 = arith.constant 0 : index
    %c0_307 = arith.constant 0 : index
    %444 = vector.load %arg5[%c0_306, %c0_307] : memref<16x32xf32, #tpu.memory_space<vmem>>, vector<16x32xf32>
    %445 = arith.index_cast %443 : i32 to index
    %c0_308 = arith.constant 0 : index
    %c0_309 = arith.constant 0 : index
    %446 = vector.load %arg4[%445, %c0_308, %c0_309] : memref<16x16x32xf32, #tpu.memory_space<vmem>>, vector<1x16x32xf32>
    %447 = vector.shape_cast %446 : vector<1x16x32xf32> to vector<16x32xf32>
    %448 = arith.truncf %444 : vector<16x32xf32> to vector<16x32xbf16>
    %cst_310 = arith.constant dense<0.000000e+00> : vector<16x32xf32>
    %449 = tpu.matmul %448, %0, %cst_310 {dimension_numbers = #tpu.dot_dimension_numbers<[1], [0], [0], [1], [0, 0, 1, 1], [], []>} : vector<16x32xbf16>, vector<32x32xbf16>, vector<16x32xf32> -> vector<16x32xf32>
    %450 = arith.addf %449, %3 : vector<16x32xf32>
    %cst_311 = arith.constant 0.000000e+00 : f32
    %451 = vector.broadcast %cst_311 : f32 to vector<16x32xf32>
    %452 = arith.maximumf %450, %451 : vector<16x32xf32>
    %453 = arith.addf %452, %447 : vector<16x32xf32>
    %454 = arith.index_cast %443 : i32 to index
    %c0_312 = arith.constant 0 : index
    %c0_313 = arith.constant 0 : index
    %455 = vector.load %arg4[%454, %c0_312, %c0_313] : memref<16x16x32xf32, #tpu.memory_space<vmem>>, vector<1x16x32xf32>
    %456 = vector.shape_cast %455 : vector<1x16x32xf32> to vector<16x32xf32>
    %457 = vector.shape_cast %453 : vector<16x32xf32> to vector<1x16x32xf32>
    tpu.vector_store %arg4[%454, %c0_312, %c0_313], %457 {strides = array<i32>} : memref<16x16x32xf32, #tpu.memory_space<vmem>>, vector<1x16x32xf32>,
    %c0_314 = arith.constant 0 : index
    %c0_315 = arith.constant 0 : index
    %458 = vector.load %arg5[%c0_314, %c0_315] : memref<16x32xf32, #tpu.memory_space<vmem>>, vector<16x32xf32>
    tpu.vector_store %arg5[%c0_314, %c0_315], %453 {strides = array<i32>} : memref<16x32xf32, #tpu.memory_space<vmem>>, vector<16x32xf32>,
    %c13_i32_316 = arith.constant 13 : i32
    %c14_i32_317 = arith.constant 14 : i32
    %459 = arith.subi %c14_i32_317, %c13_i32_316 : i32
    %c0_318 = arith.constant 0 : index
    %c0_319 = arith.constant 0 : index
    %460 = vector.load %arg5[%c0_318, %c0_319] : memref<16x32xf32, #tpu.memory_space<vmem>>, vector<16x32xf32>
    %461 = arith.index_cast %459 : i32 to index
    %c0_320 = arith.constant 0 : index
    %c0_321 = arith.constant 0 : index
    %462 = vector.load %arg4[%461, %c0_320, %c0_321] : memref<16x16x32xf32, #tpu.memory_space<vmem>>, vector<1x16x32xf32>
    %463 = vector.shape_cast %462 : vector<1x16x32xf32> to vector<16x32xf32>
    %464 = arith.truncf %460 : vector<16x32xf32> to vector<16x32xbf16>
    %cst_322 = arith.constant dense<0.000000e+00> : vector<16x32xf32>
    %465 = tpu.matmul %464, %0, %cst_322 {dimension_numbers = #tpu.dot_dimension_numbers<[1], [0], [0], [1], [0, 0, 1, 1], [], []>} : vector<16x32xbf16>, vector<32x32xbf16>, vector<16x32xf32> -> vector<16x32xf32>
    %466 = arith.addf %465, %3 : vector<16x32xf32>
    %cst_323 = arith.constant 0.000000e+00 : f32
    %467 = vector.broadcast %cst_323 : f32 to vector<16x32xf32>
    %468 = arith.maximumf %466, %467 : vector<16x32xf32>
    %469 = arith.addf %468, %463 : vector<16x32xf32>
    %470 = arith.index_cast %459 : i32 to index
    %c0_324 = arith.constant 0 : index
    %c0_325 = arith.constant 0 : index
    %471 = vector.load %arg4[%470, %c0_324, %c0_325] : memref<16x16x32xf32, #tpu.memory_space<vmem>>, vector<1x16x32xf32>
    %472 = vector.shape_cast %471 : vector<1x16x32xf32> to vector<16x32xf32>
    %473 = vector.shape_cast %469 : vector<16x32xf32> to vector<1x16x32xf32>
    tpu.vector_store %arg4[%470, %c0_324, %c0_325], %473 {strides = array<i32>} : memref<16x16x32xf32, #tpu.memory_space<vmem>>, vector<1x16x32xf32>,
    %c0_326 = arith.constant 0 : index
    %c0_327 = arith.constant 0 : index
    %474 = vector.load %arg5[%c0_326, %c0_327] : memref<16x32xf32, #tpu.memory_space<vmem>>, vector<16x32xf32>
    tpu.vector_store %arg5[%c0_326, %c0_327], %469 {strides = array<i32>} : memref<16x32xf32, #tpu.memory_space<vmem>>, vector<16x32xf32>,
    %c14_i32_328 = arith.constant 14 : i32
    %c14_i32_329 = arith.constant 14 : i32
    %475 = arith.subi %c14_i32_329, %c14_i32_328 : i32
    %c0_330 = arith.constant 0 : index
    %c0_331 = arith.constant 0 : index
    %476 = vector.load %arg5[%c0_330, %c0_331] : memref<16x32xf32, #tpu.memory_space<vmem>>, vector<16x32xf32>
    %477 = arith.index_cast %475 : i32 to index
    %c0_332 = arith.constant 0 : index
    %c0_333 = arith.constant 0 : index
    %478 = vector.load %arg4[%477, %c0_332, %c0_333] : memref<16x16x32xf32, #tpu.memory_space<vmem>>, vector<1x16x32xf32>
    %479 = vector.shape_cast %478 : vector<1x16x32xf32> to vector<16x32xf32>
    %480 = arith.truncf %476 : vector<16x32xf32> to vector<16x32xbf16>
    %cst_334 = arith.constant dense<0.000000e+00> : vector<16x32xf32>
    %481 = tpu.matmul %480, %0, %cst_334 {dimension_numbers = #tpu.dot_dimension_numbers<[1], [0], [0], [1], [0, 0, 1, 1], [], []>} : vector<16x32xbf16>, vector<32x32xbf16>, vector<16x32xf32> -> vector<16x32xf32>
    %482 = arith.addf %481, %3 : vector<16x32xf32>
    %cst_335 = arith.constant 0.000000e+00 : f32
    %483 = vector.broadcast %cst_335 : f32 to vector<16x32xf32>
    %484 = arith.maximumf %482, %483 : vector<16x32xf32>
    %485 = arith.addf %484, %479 : vector<16x32xf32>
    %486 = arith.index_cast %475 : i32 to index
    %c0_336 = arith.constant 0 : index
    %c0_337 = arith.constant 0 : index
    %487 = vector.load %arg4[%486, %c0_336, %c0_337] : memref<16x16x32xf32, #tpu.memory_space<vmem>>, vector<1x16x32xf32>
    %488 = vector.shape_cast %487 : vector<1x16x32xf32> to vector<16x32xf32>
    %489 = vector.shape_cast %485 : vector<16x32xf32> to vector<1x16x32xf32>
    tpu.vector_store %arg4[%486, %c0_336, %c0_337], %489 {strides = array<i32>} : memref<16x16x32xf32, #tpu.memory_space<vmem>>, vector<1x16x32xf32>,
    %c0_338 = arith.constant 0 : index
    %c0_339 = arith.constant 0 : index
    %490 = vector.load %arg5[%c0_338, %c0_339] : memref<16x32xf32, #tpu.memory_space<vmem>>, vector<16x32xf32>
    tpu.vector_store %arg5[%c0_338, %c0_339], %485 {strides = array<i32>} : memref<16x32xf32, #tpu.memory_space<vmem>>, vector<16x32xf32>,
    %c15_i32_340 = arith.constant 15 : i32
    return
  }
  func.func @transform_0(%arg0: i32) -> (i32, i32) {
    %c0_i32 = arith.constant 0 : i32
    %c0_i32_0 = arith.constant 0 : i32
    %c0_i32_1 = arith.constant 0 : i32
    return %c0_i32, %c0_i32_0 : i32, i32
  }
  func.func @transform_1(%arg0: i32) -> (i32, i32) {
    %c0_i32 = arith.constant 0 : i32
    %c0_i32_0 = arith.constant 0 : i32
    %c0_i32_1 = arith.constant 0 : i32
    return %c0_i32, %c0_i32_0 : i32, i32
  }
  func.func @transform_2(%arg0: i32) -> (i32, i32, i32) {
    %c0_i32 = arith.constant 0 : i32
    %c0_i32_0 = arith.constant 0 : i32
    %c0_i32_1 = arith.constant 0 : i32
    return %c0_i32, %arg0, %c0_i32_0 : i32, i32, i32
  }
  func.func @transform_3(%arg0: i32) -> (i32, i32, i32) {
    %c0_i32 = arith.constant 0 : i32
    %c0_i32_0 = arith.constant 0 : i32
    %c0_i32_1 = arith.constant 0 : i32
    return %c0_i32, %arg0, %c0_i32_0 : i32, i32, i32
  }
}

</mosaic_0001>

<llo_original>
// kernel: conv_du_forward.1
$region0: #{conv_du_forward.1}
  #allocation0 [shape = 'u32[]', space=smem, size = 0x4, offset = 0x4, fixed_abs, tag = 'smem constant byte address 0x4 - core index']
  #allocation1 [shape = 'u32[72,128]{1,0:T(1,128)}', space=vmem, size = 0x9000, scoped, tag = 'internal scratch']
  #allocation2 [shape = 'f32[16,32]{1,0:T(8,128)}', space=vmem, size = 0x2000, scoped, tag = 'scratch operand']
  %s0 = inlined_call_operand.vmem [shape: bf16[32,32], index: 0, kind: input, shape index: {}]
  %s1 = inlined_call_operand.vmem [shape: f32[1,32], index: 1, kind: input, shape index: {}]
  %s2 = inlined_call_operand.vmem [shape: bf16[16,32,32], index: 2, kind: input, shape index: {}]
  %s3 = inlined_call_operand.vmem [shape: f32[16,32,32], index: 3, kind: output, shape index: {}]
  %s4 = sld [smem:[#allocation0]]
  $region120: #{conv_du_forward.1} parent=0
    _
  %s6 = ssub.s32 1, %s4
  %s7 = scalar_select 0, %s6, %s4
  $region1: #{conv_du_forward.1} parent=0
    #allocation3 [shape = 'u8[131072]{0}', space=vmem, size = 0x20000, scoped, tag = 'input window, operand 2']
    #allocation4 [shape = 'u8[262144]{0}', space=vmem, size = 0x40000, scoped, tag = 'output window, operand 0']
    loop: start=0, step=1, limit=4
    $region2: #{conv_du_forward.1} parent=1 // loop_pre_header
      _
    $region3: #{conv_du_forward.1} parent=1 // loop_header
      %s9 = sphi 0, %s13
      %p10 = scmp.ge.s32.totalorder %s9, 4
      %s17 = sphi 0, %s17
      %s19 = sphi 0, %s17
      %s20 = sphi 0, %s19
      %s34 = sphi 0, %s20
      %s38 = sphi 0, %s38
      %s40 = sphi 0, %s38
      %s41 = sphi 0, %s40
      %s55 = sphi 0, %s41
      %s61 = sphi 0, %s63
      %s64 = sphi 0, %s61
      %s65 = sphi 0, %s64
      %s81 = sphi 0, %s65
      %s87 = sphi 0, %s89
      %s90 = sphi 0, %s87
      %s91 = sphi 0, %s90
      %s107 = sphi 0, %s91
    $region4: #{conv_du_forward.1} parent=1 // loop_header_branch
      %12 = sbr.rel (%p10) target = $region8
    $region5: #{conv_du_forward.1} parent=1 // loop_body
      %s14 = ssub.s32 %s9, 1
      %s15 = ssub.s32 %s9, 2
      %s16 = sadd.s32 %s9, 1
      %s18 = sadd.s32 %s17, 1
      %p21 = scmp.eq.s32.totalorder %s9, 1
      %p22 = scmp.ne.s32.totalorder %s17, %s19
      %p23 = scmp.eq.s32.totalorder %s9, 0
      %p24 = por %p22, %p23
      %p25 = scmp.ne.s32.totalorder %s17, %s19
      %p26 = scmp.eq.s32.totalorder %s14, 1
      %p27 = por %p25, %p26
      %p28 = scmp.ne.s32.totalorder %s19, %s20
      %p29 = scmp.eq.s32.totalorder %s14, 0
      %p30 = por %p28, %p29
      %p31 = scmp.ne.s32.totalorder %s19, %s20
      %p32 = scmp.eq.s32.totalorder %s15, 1
      %p33 = por %p31, %p32
      %p35 = scmp.ne.s32.totalorder %s20, %s34
      %p36 = scmp.eq.s32.totalorder %s15, 0
      %p37 = por %p35, %p36
      %s39 = sadd.s32 %s38, 1
      %p42 = scmp.eq.s32.totalorder %s9, 1
      %p43 = scmp.ne.s32.totalorder %s38, %s40
      %p44 = scmp.eq.s32.totalorder %s9, 0
      %p45 = por %p43, %p44
      %p46 = scmp.ne.s32.totalorder %s38, %s40
      %p47 = scmp.eq.s32.totalorder %s14, 1
      %p48 = por %p46, %p47
      %p49 = scmp.ne.s32.totalorder %s40, %s41
      %p50 = scmp.eq.s32.totalorder %s14, 0
      %p51 = por %p49, %p50
      %p52 = scmp.ne.s32.totalorder %s40, %s41
      %p53 = scmp.eq.s32.totalorder %s15, 1
      %p54 = por %p52, %p53
      %p56 = scmp.ne.s32.totalorder %s41, %s55
      %p57 = scmp.eq.s32.totalorder %s15, 0
      %p58 = por %p56, %p57
      %s59 = ssub.s32 %s9, %s16
      %p60 = scmp.eq.s32.totalorder %s59, 0
      %s62 = sadd.s32 %s61, 1
      %s63 = scalar_select %p60, %s61, %s62
      %p66 = pneg %p60
      %p67 = scmp.eq.s32.totalorder %s9, 1
      %p68 = por %p66, %p67
      %p69 = scmp.ne.s32.totalorder %s61, %s64
      %p70 = scmp.eq.s32.totalorder %s9, 0
      %p71 = por %p69, %p70
      %p72 = scmp.ne.s32.totalorder %s61, %s64
      %p73 = scmp.eq.s32.totalorder %s14, 1
      %p74 = por %p72, %p73
      %p75 = scmp.ne.s32.totalorder %s64, %s65
      %p76 = scmp.eq.s32.totalorder %s14, 0
      %p77 = por %p75, %p76
      %p78 = scmp.ne.s32.totalorder %s64, %s65
      %p79 = scmp.eq.s32.totalorder %s15, 1
      %p80 = por %p78, %p79
      %p82 = scmp.ne.s32.totalorder %s65, %s81
      %p83 = scmp.eq.s32.totalorder %s15, 0
      %p84 = por %p82, %p83
      %s85 = ssub.s32 %s9, %s16
      %p86 = scmp.eq.s32.totalorder %s85, 0
      %s88 = sadd.s32 %s87, 1
      %s89 = scalar_select %p86, %s87, %s88
      %p92 = pneg %p86
      %p93 = scmp.eq.s32.totalorder %s9, 1
      %p94 = por %p92, %p93
      %p95 = scmp.ne.s32.totalorder %s87, %s90
      %p96 = scmp.eq.s32.totalorder %s9, 0
      %p97 = por %p95, %p96
      %p98 = scmp.ne.s32.totalorder %s87, %s90
      %p99 = scmp.eq.s32.totalorder %s14, 1
      %p100 = por %p98, %p99
      %p101 = scmp.ne.s32.totalorder %s90, %s91
      %p102 = scmp.eq.s32.totalorder %s14, 0
      %p103 = por %p101, %p102
      %p104 = scmp.ne.s32.totalorder %s90, %s91
      %p105 = scmp.eq.s32.totalorder %s15, 1
      %p106 = por %p104, %p105
      %p108 = scmp.ne.s32.totalorder %s91, %s107
      %p109 = scmp.eq.s32.totalorder %s15, 0
      %p110 = por %p108, %p109
      %p111 = scmp.le.s32.totalorder 1, %s9
      %p112 = scmp.lt.s32.totalorder %s9, 3
      %p113 = pnand %p111, %p112
      %p114 = pneg %p113
      // Predicated region
      $region9: #{conv_du_forward.1} parent=5 // pred_check
        _
      $region10: #{conv_du_forward.1} parent=5 // pred_check_branch
        %116 = sbr.rel (%p113) target = $region12
      $region11: #{conv_du_forward.1} parent=5 // pred_region
        %s117 = ssub.s32 %s9, 1
        // Predicated region
        $region13: #{conv_du_forward.1} parent=11 // pred_check
          %p118 = pneg %p30
        $region14: #{conv_du_forward.1} parent=11 // pred_check_branch
          %120 = sbr.rel (%p118) target = $region16
        $region15: #{conv_du_forward.1} parent=11 // pred_region
          _
        $region16: #{conv_du_forward.1} parent=11 // pred_fallthru
          _
        // Predicated region
        $region17: #{conv_du_forward.1} parent=11 // pred_check
          %p121 = pneg %p51
        $region18: #{conv_du_forward.1} parent=11 // pred_check_branch
          %123 = sbr.rel (%p121) target = $region20
        $region19: #{conv_du_forward.1} parent=11 // pred_region
          _
        $region20: #{conv_du_forward.1} parent=11 // pred_fallthru
          _
      $region12: #{conv_du_forward.1} parent=5 // pred_fallthru
        _
      %p124 = scmp.lt.s32.totalorder %s9, 2
      // Predicated region
      $region21: #{conv_du_forward.1} parent=5 // pred_check
        %p125 = pneg %p124
      $region22: #{conv_du_forward.1} parent=5 // pred_check_branch
        %127 = sbr.rel (%p125) target = $region24
      $region23: #{conv_du_forward.1} parent=5 // pred_region
        // Predicated region
        $region25: #{conv_du_forward.1} parent=23 // pred_check
          %p128 = pneg %p71
        $region26: #{conv_du_forward.1} parent=23 // pred_check_branch
          %130 = sbr.rel (%p128) target = $region28
        $region27: #{conv_du_forward.1} parent=23 // pred_region
          %s131 = sand.u32 %s61, 1
          %s132 = sand.u32 %s61, 1
          %s133 = smul.addr %s132, 128
          %s134 = scalar_lea.vmem [#allocation3], %s133
          %s135 = smul.u32 2, %s9
          %s136 = smul.addr %s135, 4
          %s137 = scalar_lea.vmem %s2, %s136
          // Predicated region
          $region29: #{conv_du_forward.1} parent=27 // pred_check
            _
          $region30: #{conv_du_forward.1} parent=27 // pred_check_branch
            %139 = sbr.rel (0) target = $region32
          $region31: #{conv_du_forward.1} parent=27 // pred_region
            // Predicated region
            $region33: #{conv_du_forward.1} parent=31 // pred_check
              _
            $region34: #{conv_du_forward.1} parent=31 // pred_check_branch
              %141 = sbr.rel target = $region36
            $region35: #{conv_du_forward.1} parent=31 // pred_region
              // Predicated region
              $region48: #{conv_du_forward.1} parent=35 // pred_check
                _
              $region49: #{conv_du_forward.1} parent=35 // pred_check_branch
                %219 = sbr.rel (0) target = $region51
              $region50: #{conv_du_forward.1} parent=35 // pred_region
                loop: start=0, step=1, limit=1
                $region52: #{conv_du_forward.1} parent=50 // loop_pre_header
                  _
                $region53: #{conv_du_forward.1} parent=50 // loop_header
                  %s221 = sphi 0, %s225
                  %p222 = scmp.ge.s32.totalorder %s221, 1
                  %s226 = sphi %s137, %s137
                  %s227 = sphi %s134, %s134
                $region54: #{conv_du_forward.1} parent=50 // loop_header_branch
                  %224 = sbr.rel (%p222) target = $region58
                $region55: #{conv_du_forward.1} parent=50 // loop_body
                  _
                $region56: #{conv_du_forward.1} parent=50 // loop_footer
                  %s225 = sadd.s32 1, %s221
                $region57: #{conv_du_forward.1} parent=50 // loop_footer_branch
                  %220 = sbr.rel target = $region53
                $region58: #{conv_du_forward.1} parent=50 // loop_exit
                  _
                %s229 = ssub.s32 16, 1
                loop: start=0, step=1, limit=1
                $region59: #{conv_du_forward.1} parent=50 // loop_pre_header
                  _
                $region60: #{conv_du_forward.1} parent=50 // loop_header
                  %s231 = sphi 0, %s235
                  %p232 = scmp.ge.s32.totalorder %s231, 1
                  %s236 = sphi %s137, %s137
                  %s237 = sphi %s134, %s134
                $region61: #{conv_du_forward.1} parent=50 // loop_header_branch
                  %234 = sbr.rel (%p232) target = $region65
                $region62: #{conv_du_forward.1} parent=50 // loop_body
                  %v238 = vld [vmem:[%s236] sm:%s229]
                  %239 = vst [vmem:[%s237] sm:%s229] %v238
                  %v240 = vld [vmem:[%s236 + $0x4] sm:%s229]
                  %241 = vst [vmem:[%s237 + $0x4] sm:%s229] %v240
                  %v242 = vld [vmem:[%s236 + $0x10] sm:%s229]
                  %243 = vst [vmem:[%s237 + $0x8] sm:%s229] %v242
                  %v244 = vld [vmem:[%s236 + $0x14] sm:%s229]
                  %245 = vst [vmem:[%s237 + $0xc] sm:%s229] %v244
                  %v246 = vld [vmem:[%s236 + $0x20] sm:%s229]
                  %247 = vst [vmem:[%s237 + $0x10] sm:%s229] %v246
                  %v248 = vld [vmem:[%s236 + $0x24] sm:%s229]
                  %249 = vst [vmem:[%s237 + $0x14] sm:%s229] %v248
                  %v250 = vld [vmem:[%s236 + $0x30] sm:%s229]
                  %251 = vst [vmem:[%s237 + $0x18] sm:%s229] %v250
                  %v252 = vld [vmem:[%s236 + $0x34] sm:%s229]
                  %253 = vst [vmem:[%s237 + $0x1c] sm:%s229] %v252
                  %v254 = vld [vmem:[%s236 + $0x40] sm:%s229]
                  %255 = vst [vmem:[%s237 + $0x20] sm:%s229] %v254
                  %v256 = vld [vmem:[%s236 + $0x44] sm:%s229]
                  %257 = vst [vmem:[%s237 + $0x24] sm:%s229] %v256
                  %v258 = vld [vmem:[%s236 + $0x50] sm:%s229]
                  %259 = vst [vmem:[%s237 + $0x28] sm:%s229] %v258
                  %v260 = vld [vmem:[%s236 + $0x54] sm:%s229]
                  %261 = vst [vmem:[%s237 + $0x2c] sm:%s229] %v260
                  %v262 = vld [vmem:[%s236 + $0x60] sm:%s229]
                  %263 = vst [vmem:[%s237 + $0x30] sm:%s229] %v262
                  %v264 = vld [vmem:[%s236 + $0x64] sm:%s229]
                  %265 = vst [vmem:[%s237 + $0x34] sm:%s229] %v264
                  %v266 = vld [vmem:[%s236 + $0x70] sm:%s229]
                  %267 = vst [vmem:[%s237 + $0x38] sm:%s229] %v266
                  %v268 = vld [vmem:[%s236 + $0x74] sm:%s229]
                  %269 = vst [vmem:[%s237 + $0x3c] sm:%s229] %v268
                  %v270 = vld [vmem:[%s236 + $0x80] sm:%s229]
                  %271 = vst [vmem:[%s237 + $0x40] sm:%s229] %v270
                  %v272 = vld [vmem:[%s236 + $0x84] sm:%s229]
                  %273 = vst [vmem:[%s237 + $0x44] sm:%s229] %v272
                  %v274 = vld [vmem:[%s236 + $0x90] sm:%s229]
                  %275 = vst [vmem:[%s237 + $0x48] sm:%s229] %v274
                  %v276 = vld [vmem:[%s236 + $0x94] sm:%s229]
                  %277 = vst [vmem:[%s237 + $0x4c] sm:%s229] %v276
                  %v278 = vld [vmem:[%s236 + $0xa0] sm:%s229]
                  %279 = vst [vmem:[%s237 + $0x50] sm:%s229] %v278
                  %v280 = vld [vmem:[%s236 + $0xa4] sm:%s229]
                  %281 = vst [vmem:[%s237 + $0x54] sm:%s229] %v280
                  %v282 = vld [vmem:[%s236 + $0xb0] sm:%s229]
                  %283 = vst [vmem:[%s237 + $0x58] sm:%s229] %v282
                  %v284 = vld [vmem:[%s236 + $0xb4] sm:%s229]
                  %285 = vst [vmem:[%s237 + $0x5c] sm:%s229] %v284
                  %v286 = vld [vmem:[%s236 + $0xc0] sm:%s229]
                  %287 = vst [vmem:[%s237 + $0x60] sm:%s229] %v286
                  %v288 = vld [vmem:[%s236 + $0xc4] sm:%s229]
                  %289 = vst [vmem:[%s237 + $0x64] sm:%s229] %v288
                  %v290 = vld [vmem:[%s236 + $0xd0] sm:%s229]
                  %291 = vst [vmem:[%s237 + $0x68] sm:%s229] %v290
                  %v292 = vld [vmem:[%s236 + $0xd4] sm:%s229]
                  %293 = vst [vmem:[%s237 + $0x6c] sm:%s229] %v292
                  %v294 = vld [vmem:[%s236 + $0xe0] sm:%s229]
                  %295 = vst [vmem:[%s237 + $0x70] sm:%s229] %v294
                  %v296 = vld [vmem:[%s236 + $0xe4] sm:%s229]
                  %297 = vst [vmem:[%s237 + $0x74] sm:%s229] %v296
                  %v298 = vld [vmem:[%s236 + $0xf0] sm:%s229]
                  %299 = vst [vmem:[%s237 + $0x78] sm:%s229] %v298
                  %v300 = vld [vmem:[%s236 + $0xf4] sm:%s229]
                  %301 = vst [vmem:[%s237 + $0x7c] sm:%s229] %v300
                $region63: #{conv_du_forward.1} parent=50 // loop_footer
                  %s235 = sadd.s32 1, %s231
                $region64: #{conv_du_forward.1} parent=50 // loop_footer_branch
                  %230 = sbr.rel target = $region60
                $region65: #{conv_du_forward.1} parent=50 // loop_exit
                  _
              $region51: #{conv_du_forward.1} parent=35 // pred_fallthru
                _
            $region36: #{conv_du_forward.1} parent=31 // pred_fallthru
              _
            // Predicated region
            $region37: #{conv_du_forward.1} parent=31 // pred_check
              _
            $region38: #{conv_du_forward.1} parent=31 // pred_check_branch
              %143 = sbr.rel (0) target = $region40
            $region39: #{conv_du_forward.1} parent=31 // pred_region
              %s145 = ssub.s32 16, 1
              loop: start=0, step=1, limit=1
              $region41: #{conv_du_forward.1} parent=39 // loop_pre_header
                _
              $region42: #{conv_du_forward.1} parent=39 // loop_header
                %s147 = sphi 0, %s151
                %p148 = scmp.ge.s32.totalorder %s147, 1
                %s152 = sphi %s137, %s137
                %s153 = sphi %s134, %s134
              $region43: #{conv_du_forward.1} parent=39 // loop_header_branch
                %150 = sbr.rel (%p148) target = $region47
              $region44: #{conv_du_forward.1} parent=39 // loop_body
                %v154 = vld [vmem:[%s152] sm:%s145]
                %155 = vst [vmem:[%s153] sm:%s145] %v154
                %v156 = vld [vmem:[%s152 + $0x4] sm:%s145]
                %157 = vst [vmem:[%s153 + $0x4] sm:%s145] %v156
                %v158 = vld [vmem:[%s152 + $0x10] sm:%s145]
                %159 = vst [vmem:[%s153 + $0x8] sm:%s145] %v158
                %v160 = vld [vmem:[%s152 + $0x14] sm:%s145]
                %161 = vst [vmem:[%s153 + $0xc] sm:%s145] %v160
                %v162 = vld [vmem:[%s152 + $0x20] sm:%s145]
                %163 = vst [vmem:[%s153 + $0x10] sm:%s145] %v162
                %v164 = vld [vmem:[%s152 + $0x24] sm:%s145]
                %165 = vst [vmem:[%s153 + $0x14] sm:%s145] %v164
                %v166 = vld [vmem:[%s152 + $0x30] sm:%s145]
                %167 = vst [vmem:[%s153 + $0x18] sm:%s145] %v166
                %v168 = vld [vmem:[%s152 + $0x34] sm:%s145]
                %169 = vst [vmem:[%s153 + $0x1c] sm:%s145] %v168
                %v170 = vld [vmem:[%s152 + $0x40] sm:%s145]
                %171 = vst [vmem:[%s153 + $0x20] sm:%s145] %v170
                %v172 = vld [vmem:[%s152 + $0x44] sm:%s145]
                %173 = vst [vmem:[%s153 + $0x24] sm:%s145] %v172
                %v174 = vld [vmem:[%s152 + $0x50] sm:%s145]
                %175 = vst [vmem:[%s153 + $0x28] sm:%s145] %v174
                %v176 = vld [vmem:[%s152 + $0x54] sm:%s145]
                %177 = vst [vmem:[%s153 + $0x2c] sm:%s145] %v176
                %v178 = vld [vmem:[%s152 + $0x60] sm:%s145]
                %179 = vst [vmem:[%s153 + $0x30] sm:%s145] %v178
                %v180 = vld [vmem:[%s152 + $0x64] sm:%s145]
                %181 = vst [vmem:[%s153 + $0x34] sm:%s145] %v180
                %v182 = vld [vmem:[%s152 + $0x70] sm:%s145]
                %183 = vst [vmem:[%s153 + $0x38] sm:%s145] %v182
                %v184 = vld [vmem:[%s152 + $0x74] sm:%s145]
                %185 = vst [vmem:[%s153 + $0x3c] sm:%s145] %v184
                %v186 = vld [vmem:[%s152 + $0x80] sm:%s145]
                %187 = vst [vmem:[%s153 + $0x40] sm:%s145] %v186
                %v188 = vld [vmem:[%s152 + $0x84] sm:%s145]
                %189 = vst [vmem:[%s153 + $0x44] sm:%s145] %v188
                %v190 = vld [vmem:[%s152 + $0x90] sm:%s145]
                %191 = vst [vmem:[%s153 + $0x48] sm:%s145] %v190
                %v192 = vld [vmem:[%s152 + $0x94] sm:%s145]
                %193 = vst [vmem:[%s153 + $0x4c] sm:%s145] %v192
                %v194 = vld [vmem:[%s152 + $0xa0] sm:%s145]
                %195 = vst [vmem:[%s153 + $0x50] sm:%s145] %v194
                %v196 = vld [vmem:[%s152 + $0xa4] sm:%s145]
                %197 = vst [vmem:[%s153 + $0x54] sm:%s145] %v196
                %v198 = vld [vmem:[%s152 + $0xb0] sm:%s145]
                %199 = vst [vmem:[%s153 + $0x58] sm:%s145] %v198
                %v200 = vld [vmem:[%s152 + $0xb4] sm:%s145]
                %201 = vst [vmem:[%s153 + $0x5c] sm:%s145] %v200
                %v202 = vld [vmem:[%s152 + $0xc0] sm:%s145]
                %203 = vst [vmem:[%s153 + $0x60] sm:%s145] %v202
                %v204 = vld [vmem:[%s152 + $0xc4] sm:%s145]
                %205 = vst [vmem:[%s153 + $0x64] sm:%s145] %v204
                %v206 = vld [vmem:[%s152 + $0xd0] sm:%s145]
                %207 = vst [vmem:[%s153 + $0x68] sm:%s145] %v206
                %v208 = vld [vmem:[%s152 + $0xd4] sm:%s145]
                %209 = vst [vmem:[%s153 + $0x6c] sm:%s145] %v208
                %v210 = vld [vmem:[%s152 + $0xe0] sm:%s145]
                %211 = vst [vmem:[%s153 + $0x70] sm:%s145] %v210
                %v212 = vld [vmem:[%s152 + $0xe4] sm:%s145]
                %213 = vst [vmem:[%s153 + $0x74] sm:%s145] %v212
                %v214 = vld [vmem:[%s152 + $0xf0] sm:%s145]
                %215 = vst [vmem:[%s153 + $0x78] sm:%s145] %v214
                %v216 = vld [vmem:[%s152 + $0xf4] sm:%s145]
                %217 = vst [vmem:[%s153 + $0x7c] sm:%s145] %v216
              $region45: #{conv_du_forward.1} parent=39 // loop_footer
                %s151 = sadd.s32 1, %s147
              $region46: #{conv_du_forward.1} parent=39 // loop_footer_branch
                %146 = sbr.rel target = $region42
              $region47: #{conv_du_forward.1} parent=39 // loop_exit
                _
            $region40: #{conv_du_forward.1} parent=31 // pred_fallthru
              _
          $region32: #{conv_du_forward.1} parent=27 // pred_fallthru
            _
          %302 = vnop
        $region28: #{conv_du_forward.1} parent=23 // pred_fallthru
          _
      $region24: #{conv_du_forward.1} parent=5 // pred_fallthru
        _
      %p303 = scmp.le.s32.totalorder 1, %s9
      %p304 = scmp.lt.s32.totalorder %s9, 3
      %p305 = pnand %p303, %p304
      %p306 = pneg %p305
      // Predicated region
      $region66: #{conv_du_forward.1} parent=5 // pred_check
        _
      $region67: #{conv_du_forward.1} parent=5 // pred_check_branch
        %308 = sbr.rel (%p305) target = $region69
      $region68: #{conv_du_forward.1} parent=5 // pred_region
        %s309 = ssub.s32 %s9, 1
        %s310 = sand.u32 %s64, 1
        %s311 = sand.u32 %s64, 1
        %s312 = smul.addr %s311, 128
        %s313 = scalar_lea.vmem [#allocation3], %s312
        // Predicated region
        $region70: #{conv_du_forward.1} parent=68 // pred_check
          %p314 = pneg %p77
        $region71: #{conv_du_forward.1} parent=68 // pred_check_branch
          %316 = sbr.rel (%p314) target = $region73
        $region72: #{conv_du_forward.1} parent=68 // pred_region
          _
        $region73: #{conv_du_forward.1} parent=68 // pred_fallthru
          _
        %p317 = pneg %p30
        %p318 = pneg %p27
        %p319 = pneg %p51
        %p320 = pneg %p48
        %s321 = sand.u32 %s64, 1
        %s322 = sand.u32 %s64, 1
        %s323 = smul.addr %s322, 128
        %s324 = scalar_lea.vmem [#allocation3], %s323
        %p325 = pneg %p77
        %p326 = pneg %p74
        %p327 = pneg %p103
        %p328 = pneg %p100
        %s329 = sand.u32 %s90, 1
        %s330 = sand.u32 %s90, 1
        %s331 = smul.addr %s330, 256
        %s332 = scalar_lea.vmem [#allocation4], %s331
        %s333 = smul.u32 2, %s14
        %s334 = smul.u32 2, %s14
        %v336 = vld [vmem:[%s0] sm:$0xf]
        %v337 = vld [vmem:[%s0 + $0x4] sm:$0xf]
        %v338 = vld [vmem:[%s0 + $0x8] sm:$0xf]
        %v339 = vld [vmem:[%s0 + $0xc] sm:$0xf]
        %v340 = vld [vmem:[%s1] sm:$0x1]
        %v342 = vperm.slane %v340, 0
        %v344 = vld [vmem:[%s313] sm:$0xf]
        %v345 = vld [vmem:[%s313 + $0x4] sm:$0xf]
        %v346 = vunpack.c.l.bf16 %v344
        %v347 = vunpack.c.l.bf16 %v345
        %vm348 = vcmask 261120
        %349 = vst.msk [vmem:[%s332] sm:$0xff] %vm348, %v346
        %350 = vst.msk [vmem:[%s332 + $0x8] sm:$0xff] %vm348, %v347
        %351 = vst.msk [vmem:[#allocation2] sm:$0xff] %vm348, %v346
        %352 = vst.msk [vmem:[#allocation2 + $0x8] sm:$0xff] %vm348, %v347
        %v353 = vld [vmem:[#allocation2] sm:$0xff]
        %v354 = vld [vmem:[#allocation2 + $0x8] sm:$0xff]
        %s355 = scalar_lea.vmem %s313, 8 [#allocation3]
        %v356 = vld [vmem:[%s355] sm:$0xf]
        %v357 = vld [vmem:[%s355 + $0x4] sm:$0xf]
        %v358 = vunpack.c.l.bf16 %v356
        %v359 = vunpack.c.l.bf16 %v357
        %v360 = vpack.c.bf16 %v354, %v353
        %v365 = vunpack.c.l.b16 %v336
        %v366 = vunpack.c.l.b16 %v337
        %v367 = vunpack.c.l.b16 %v338
        %v368 = vunpack.c.l.b16 %v339
        %v369 = vpack.c.b16 %v366, %v365
        %v370 = vpack.c.b16 %v368, %v367
        %v374 = vsel %vm348, %v360, 0
        %376 = vmatpush.bf16.msra.mxu0 0
        %377 = vmatpush.bf16.msra.mxu0 0
        %378 = vmatpush.bf16.msra.mxu0 0
        %379 = vmatpush.bf16.msra.mxu0 0
        %380 = vmatpush.bf16.msra.mxu0 0
        %381 = vmatpush.bf16.msra.mxu0 0
        %382 = vmatpush.bf16.msra.mxu0 %v370
        %383 = vmatpush.bf16.msra.mxu0 %v369
        %384 = vmatmul.bf16.gmra.mxu0 %v374
        %v385 = vpop.f32.mrf.mxu0
        %v386 = vadd.f32 %v342, %v385
        %v387 = vpop.f32.mrf.mxu0
        %v388 = vadd.f32 %v342, %v387
        %389 = vdwg.mxu0
        %v390 = vmax.f32 %v386, 0.0
        %v391 = vmax.f32 %v388, 0.0
        %v392 = vadd.f32 %v390, %v358
        %v393 = vadd.f32 %v391, %v359
        %s394 = scalar_lea.vmem %s332, 16 [#allocation4]
        %395 = vst.msk [vmem:[%s394] sm:$0xff] %vm348, %v392
        %396 = vst.msk [vmem:[%s394 + $0x8] sm:$0xff] %vm348, %v393
        %397 = vst.msk [vmem:[#allocation2] sm:$0xff] %vm348, %v392
        %398 = vst.msk [vmem:[#allocation2 + $0x8] sm:$0xff] %vm348, %v393
        %v399 = vld [vmem:[#allocation2] sm:$0xff]
        %v400 = vld [vmem:[#allocation2 + $0x8] sm:$0xff]
        %s401 = scalar_lea.vmem %s313, 16 [#allocation3]
        %v402 = vld [vmem:[%s401] sm:$0xf]
        %v403 = vld [vmem:[%s401 + $0x4] sm:$0xf]
        %v404 = vunpack.c.l.bf16 %v402
        %v405 = vunpack.c.l.bf16 %v403
        %v406 = vpack.c.bf16 %v400, %v399
        %v408 = vsel %vm348, %v406, 0
        %410 = vmatpush.bf16.msra.mxu0 0
        %411 = vmatpush.bf16.msra.mxu0 0
        %412 = vmatpush.bf16.msra.mxu0 0
        %413 = vmatpush.bf16.msra.mxu0 0
        %414 = vmatpush.bf16.msra.mxu0 0
        %415 = vmatpush.bf16.msra.mxu0 0
        %416 = vmatpush.bf16.msra.mxu0 %v370
        %417 = vmatpush.bf16.msra.mxu0 %v369
        %418 = vmatmul.bf16.gmra.mxu0 %v408
        %v419 = vpop.f32.mrf.mxu0
        %v420 = vadd.f32 %v342, %v419
        %v421 = vpop.f32.mrf.mxu0
        %v422 = vadd.f32 %v342, %v421
        %423 = vdwg.mxu0
        %v424 = vmax.f32 %v420, 0.0
        %v425 = vmax.f32 %v422, 0.0
        %v426 = vadd.f32 %v424, %v404
        %v427 = vadd.f32 %v425, %v405
        %s428 = scalar_lea.vmem %s332, 32 [#allocation4]
        %429 = vst.msk [vmem:[%s428] sm:$0xff] %vm348, %v426
        %430 = vst.msk [vmem:[%s428 + $0x8] sm:$0xff] %vm348, %v427
        %431 = vst.msk [vmem:[#allocation2] sm:$0xff] %vm348, %v426
        %432 = vst.msk [vmem:[#allocation2 + $0x8] sm:$0xff] %vm348, %v427
        %v433 = vld [vmem:[#allocation2] sm:$0xff]
        %v434 = vld [vmem:[#allocation2 + $0x8] sm:$0xff]
        %s435 = scalar_lea.vmem %s313, 24 [#allocation3]
        %v436 = vld [vmem:[%s435] sm:$0xf]
        %v437 = vld [vmem:[%s435 + $0x4] sm:$0xf]
        %v438 = vunpack.c.l.bf16 %v436
        %v439 = vunpack.c.l.bf16 %v437
        %v440 = vpack.c.bf16 %v434, %v433
        %v442 = vsel %vm348, %v440, 0
        %444 = vmatpush.bf16.msra.mxu0 0
        %445 = vmatpush.bf16.msra.mxu0 0
        %446 = vmatpush.bf16.msra.mxu0 0
        %447 = vmatpush.bf16.msra.mxu0 0
        %448 = vmatpush.bf16.msra.mxu0 0
        %449 = vmatpush.bf16.msra.mxu0 0
        %450 = vmatpush.bf16.msra.mxu0 %v370
        %451 = vmatpush.bf16.msra.mxu0 %v369
        %452 = vmatmul.bf16.gmra.mxu0 %v442
        %v453 = vpop.f32.mrf.mxu0
        %v454 = vadd.f32 %v342, %v453
        %v455 = vpop.f32.mrf.mxu0
        %v456 = vadd.f32 %v342, %v455
        %457 = vdwg.mxu0
        %v458 = vmax.f32 %v454, 0.0
        %v459 = vmax.f32 %v456, 0.0
        %v460 = vadd.f32 %v458, %v438
        %v461 = vadd.f32 %v459, %v439
        %s462 = scalar_lea.vmem %s332, 48 [#allocation4]
        %463 = vst.msk [vmem:[%s462] sm:$0xff] %vm348, %v460
        %464 = vst.msk [vmem:[%s462 + $0x8] sm:$0xff] %vm348, %v461
        %465 = vst.msk [vmem:[#allocation2] sm:$0xff] %vm348, %v460
        %466 = vst.msk [vmem:[#allocation2 + $0x8] sm:$0xff] %vm348, %v461
        %v467 = vld [vmem:[#allocation2] sm:$0xff]
        %v468 = vld [vmem:[#allocation2 + $0x8] sm:$0xff]
        %s469 = scalar_lea.vmem %s313, 32 [#allocation3]
        %v470 = vld [vmem:[%s469] sm:$0xf]
        %v471 = vld [vmem:[%s469 + $0x4] sm:$0xf]
        %v472 = vunpack.c.l.bf16 %v470
        %v473 = vunpack.c.l.bf16 %v471
        %v474 = vpack.c.bf16 %v468, %v467
        %v476 = vsel %vm348, %v474, 0
        %478 = vmatpush.bf16.msra.mxu0 0
        %479 = vmatpush.bf16.msra.mxu0 0
        %480 = vmatpush.bf16.msra.mxu0 0
        %481 = vmatpush.bf16.msra.mxu0 0
        %482 = vmatpush.bf16.msra.mxu0 0
        %483 = vmatpush.bf16.msra.mxu0 0
        %484 = vmatpush.bf16.msra.mxu0 %v370
        %485 = vmatpush.bf16.msra.mxu0 %v369
        %486 = vmatmul.bf16.gmra.mxu0 %v476
        %v487 = vpop.f32.mrf.mxu0
        %v488 = vadd.f32 %v342, %v487
        %v489 = vpop.f32.mrf.mxu0
        %v490 = vadd.f32 %v342, %v489
        %491 = vdwg.mxu0
        %v492 = vmax.f32 %v488, 0.0
        %v493 = vmax.f32 %v490, 0.0
        %v494 = vadd.f32 %v492, %v472
        %v495 = vadd.f32 %v493, %v473
        %s496 = scalar_lea.vmem %s332, 64 [#allocation4]
        %497 = vst.msk [vmem:[%s496] sm:$0xff] %vm348, %v494
        %498 = vst.msk [vmem:[%s496 + $0x8] sm:$0xff] %vm348, %v495
        %499 = vst.msk [vmem:[#allocation2] sm:$0xff] %vm348, %v494
        %500 = vst.msk [vmem:[#allocation2 + $0x8] sm:$0xff] %vm348, %v495
        %v501 = vld [vmem:[#allocation2] sm:$0xff]
        %v502 = vld [vmem:[#allocation2 + $0x8] sm:$0xff]
        %s503 = scalar_lea.vmem %s313, 40 [#allocation3]
        %v504 = vld [vmem:[%s503] sm:$0xf]
        %v505 = vld [vmem:[%s503 + $0x4] sm:$0xf]
        %v506 = vunpack.c.l.bf16 %v504
        %v507 = vunpack.c.l.bf16 %v505
        %v508 = vpack.c.bf16 %v502, %v501
        %v510 = vsel %vm348, %v508, 0
        %512 = vmatpush.bf16.msra.mxu0 0
        %513 = vmatpush.bf16.msra.mxu0 0
        %514 = vmatpush.bf16.msra.mxu0 0
        %515 = vmatpush.bf16.msra.mxu0 0
        %516 = vmatpush.bf16.msra.mxu0 0
        %517 = vmatpush.bf16.msra.mxu0 0
        %518 = vmatpush.bf16.msra.mxu0 %v370
        %519 = vmatpush.bf16.msra.mxu0 %v369
        %520 = vmatmul.bf16.gmra.mxu0 %v510
        %v521 = vpop.f32.mrf.mxu0
        %v522 = vadd.f32 %v342, %v521
        %v523 = vpop.f32.mrf.mxu0
        %v524 = vadd.f32 %v342, %v523
        %525 = vdwg.mxu0
        %v526 = vmax.f32 %v522, 0.0
        %v527 = vmax.f32 %v524, 0.0
        %v528 = vadd.f32 %v526, %v506
        %v529 = vadd.f32 %v527, %v507
        %s530 = scalar_lea.vmem %s332, 80 [#allocation4]
        %531 = vst.msk [vmem:[%s530] sm:$0xff] %vm348, %v528
        %532 = vst.msk [vmem:[%s530 + $0x8] sm:$0xff] %vm348, %v529
        %533 = vst.msk [vmem:[#allocation2] sm:$0xff] %vm348, %v528
        %534 = vst.msk [vmem:[#allocation2 + $0x8] sm:$0xff] %vm348, %v529
        %v535 = vld [vmem:[#allocation2] sm:$0xff]
        %v536 = vld [vmem:[#allocation2 + $0x8] sm:$0xff]
        %s537 = scalar_lea.vmem %s313, 48 [#allocation3]
        %v538 = vld [vmem:[%s537] sm:$0xf]
        %v539 = vld [vmem:[%s537 + $0x4] sm:$0xf]
        %v540 = vunpack.c.l.bf16 %v538
        %v541 = vunpack.c.l.bf16 %v539
        %v542 = vpack.c.bf16 %v536, %v535
        %v544 = vsel %vm348, %v542, 0
        %546 = vmatpush.bf16.msra.mxu0 0
        %547 = vmatpush.bf16.msra.mxu0 0
        %548 = vmatpush.bf16.msra.mxu0 0
        %549 = vmatpush.bf16.msra.mxu0 0
        %550 = vmatpush.bf16.msra.mxu0 0
        %551 = vmatpush.bf16.msra.mxu0 0
        %552 = vmatpush.bf16.msra.mxu0 %v370
        %553 = vmatpush.bf16.msra.mxu0 %v369
        %554 = vmatmul.bf16.gmra.mxu0 %v544
        %v555 = vpop.f32.mrf.mxu0
        %v556 = vadd.f32 %v342, %v555
        %v557 = vpop.f32.mrf.mxu0
        %v558 = vadd.f32 %v342, %v557
        %559 = vdwg.mxu0
        %v560 = vmax.f32 %v556, 0.0
        %v561 = vmax.f32 %v558, 0.0
        %v562 = vadd.f32 %v560, %v540
        %v563 = vadd.f32 %v561, %v541
        %s564 = scalar_lea.vmem %s332, 96 [#allocation4]
        %565 = vst.msk [vmem:[%s564] sm:$0xff] %vm348, %v562
        %566 = vst.msk [vmem:[%s564 + $0x8] sm:$0xff] %vm348, %v563
        %567 = vst.msk [vmem:[#allocation2] sm:$0xff] %vm348, %v562
        %568 = vst.msk [vmem:[#allocation2 + $0x8] sm:$0xff] %vm348, %v563
        %v569 = vld [vmem:[#allocation2] sm:$0xff]
        %v570 = vld [vmem:[#allocation2 + $0x8] sm:$0xff]
        %s571 = scalar_lea.vmem %s313, 56 [#allocation3]
        %v572 = vld [vmem:[%s571] sm:$0xf]
        %v573 = vld [vmem:[%s571 + $0x4] sm:$0xf]
        %v574 = vunpack.c.l.bf16 %v572
        %v575 = vunpack.c.l.bf16 %v573
        %v576 = vpack.c.bf16 %v570, %v569
        %v578 = vsel %vm348, %v576, 0
        %580 = vmatpush.bf16.msra.mxu0 0
        %581 = vmatpush.bf16.msra.mxu0 0
        %582 = vmatpush.bf16.msra.mxu0 0
        %583 = vmatpush.bf16.msra.mxu0 0
        %584 = vmatpush.bf16.msra.mxu0 0
        %585 = vmatpush.bf16.msra.mxu0 0
        %586 = vmatpush.bf16.msra.mxu0 %v370
        %587 = vmatpush.bf16.msra.mxu0 %v369
        %588 = vmatmul.bf16.gmra.mxu0 %v578
        %v589 = vpop.f32.mrf.mxu0
        %v590 = vadd.f32 %v342, %v589
        %v591 = vpop.f32.mrf.mxu0
        %v592 = vadd.f32 %v342, %v591
        %593 = vdwg.mxu0
        %v594 = vmax.f32 %v590, 0.0
        %v595 = vmax.f32 %v592, 0.0
        %v596 = vadd.f32 %v594, %v574
        %v597 = vadd.f32 %v595, %v575
        %s598 = scalar_lea.vmem %s332, 112 [#allocation4]
        %599 = vst.msk [vmem:[%s598] sm:$0xff] %vm348, %v596
        %600 = vst.msk [vmem:[%s598 + $0x8] sm:$0xff] %vm348, %v597
        %601 = vst.msk [vmem:[#allocation2] sm:$0xff] %vm348, %v596
        %602 = vst.msk [vmem:[#allocation2 + $0x8] sm:$0xff] %vm348, %v597
        %v603 = vld [vmem:[#allocation2] sm:$0xff]
        %v604 = vld [vmem:[#allocation2 + $0x8] sm:$0xff]
        %s605 = scalar_lea.vmem %s313, 64 [#allocation3]
        %v606 = vld [vmem:[%s605] sm:$0xf]
        %v607 = vld [vmem:[%s605 + $0x4] sm:$0xf]
        %v608 = vunpack.c.l.bf16 %v606
        %v609 = vunpack.c.l.bf16 %v607
        %v610 = vpack.c.bf16 %v604, %v603
        %v612 = vsel %vm348, %v610, 0
        %614 = vmatpush.bf16.msra.mxu0 0
        %615 = vmatpush.bf16.msra.mxu0 0
        %616 = vmatpush.bf16.msra.mxu0 0
        %617 = vmatpush.bf16.msra.mxu0 0
        %618 = vmatpush.bf16.msra.mxu0 0
        %619 = vmatpush.bf16.msra.mxu0 0
        %620 = vmatpush.bf16.msra.mxu0 %v370
        %621 = vmatpush.bf16.msra.mxu0 %v369
        %622 = vmatmul.bf16.gmra.mxu0 %v612
        %v623 = vpop.f32.mrf.mxu0
        %v624 = vadd.f32 %v342, %v623
        %v625 = vpop.f32.mrf.mxu0
        %v626 = vadd.f32 %v342, %v625
        %627 = vdwg.mxu0
        %v628 = vmax.f32 %v624, 0.0
        %v629 = vmax.f32 %v626, 0.0
        %v630 = vadd.f32 %v628, %v608
        %v631 = vadd.f32 %v629, %v609
        %s632 = scalar_lea.vmem %s332, 128 [#allocation4]
        %633 = vst.msk [vmem:[%s632] sm:$0xff] %vm348, %v630
        %634 = vst.msk [vmem:[%s632 + $0x8] sm:$0xff] %vm348, %v631
        %635 = vst.msk [vmem:[#allocation2] sm:$0xff] %vm348, %v630
        %636 = vst.msk [vmem:[#allocation2 + $0x8] sm:$0xff] %vm348, %v631
        %v637 = vld [vmem:[#allocation2] sm:$0xff]
        %v638 = vld [vmem:[#allocation2 + $0x8] sm:$0xff]
        %s639 = scalar_lea.vmem %s313, 72 [#allocation3]
        %v640 = vld [vmem:[%s639] sm:$0xf]
        %v641 = vld [vmem:[%s639 + $0x4] sm:$0xf]
        %v642 = vunpack.c.l.bf16 %v640
        %v643 = vunpack.c.l.bf16 %v641
        %v644 = vpack.c.bf16 %v638, %v637
        %v646 = vsel %vm348, %v644, 0
        %648 = vmatpush.bf16.msra.mxu0 0
        %649 = vmatpush.bf16.msra.mxu0 0
        %650 = vmatpush.bf16.msra.mxu0 0
        %651 = vmatpush.bf16.msra.mxu0 0
        %652 = vmatpush.bf16.msra.mxu0 0
        %653 = vmatpush.bf16.msra.mxu0 0
        %654 = vmatpush.bf16.msra.mxu0 %v370
        %655 = vmatpush.bf16.msra.mxu0 %v369
        %656 = vmatmul.bf16.gmra.mxu0 %v646
        %v657 = vpop.f32.mrf.mxu0
        %v658 = vadd.f32 %v342, %v657
        %v659 = vpop.f32.mrf.mxu0
        %v660 = vadd.f32 %v342, %v659
        %661 = vdwg.mxu0
        %v662 = vmax.f32 %v658, 0.0
        %v663 = vmax.f32 %v660, 0.0
        %v664 = vadd.f32 %v662, %v642
        %v665 = vadd.f32 %v663, %v643
        %s666 = scalar_lea.vmem %s332, 144 [#allocation4]
        %667 = vst.msk [vmem:[%s666] sm:$0xff] %vm348, %v664
        %668 = vst.msk [vmem:[%s666 + $0x8] sm:$0xff] %vm348, %v665
        %669 = vst.msk [vmem:[#allocation2] sm:$0xff] %vm348, %v664
        %670 = vst.msk [vmem:[#allocation2 + $0x8] sm:$0xff] %vm348, %v665
        %v671 = vld [vmem:[#allocation2] sm:$0xff]
        %v672 = vld [vmem:[#allocation2 + $0x8] sm:$0xff]
        %s673 = scalar_lea.vmem %s313, 80 [#allocation3]
        %v674 = vld [vmem:[%s673] sm:$0xf]
        %v675 = vld [vmem:[%s673 + $0x4] sm:$0xf]
        %v676 = vunpack.c.l.bf16 %v674
        %v677 = vunpack.c.l.bf16 %v675
        %v678 = vpack.c.bf16 %v672, %v671
        %v680 = vsel %vm348, %v678, 0
        %682 = vmatpush.bf16.msra.mxu0 0
        %683 = vmatpush.bf16.msra.mxu0 0
        %684 = vmatpush.bf16.msra.mxu0 0
        %685 = vmatpush.bf16.msra.mxu0 0
        %686 = vmatpush.bf16.msra.mxu0 0
        %687 = vmatpush.bf16.msra.mxu0 0
        %688 = vmatpush.bf16.msra.mxu0 %v370
        %689 = vmatpush.bf16.msra.mxu0 %v369
        %690 = vmatmul.bf16.gmra.mxu0 %v680
        %v691 = vpop.f32.mrf.mxu0
        %v692 = vadd.f32 %v342, %v691
        %v693 = vpop.f32.mrf.mxu0
        %v694 = vadd.f32 %v342, %v693
        %695 = vdwg.mxu0
        %v696 = vmax.f32 %v692, 0.0
        %v697 = vmax.f32 %v694, 0.0
        %v698 = vadd.f32 %v696, %v676
        %v699 = vadd.f32 %v697, %v677
        %s700 = scalar_lea.vmem %s332, 160 [#allocation4]
        %701 = vst.msk [vmem:[%s700] sm:$0xff] %vm348, %v698
        %702 = vst.msk [vmem:[%s700 + $0x8] sm:$0xff] %vm348, %v699
        %703 = vst.msk [vmem:[#allocation2] sm:$0xff] %vm348, %v698
        %704 = vst.msk [vmem:[#allocation2 + $0x8] sm:$0xff] %vm348, %v699
        %v705 = vld [vmem:[#allocation2] sm:$0xff]
        %v706 = vld [vmem:[#allocation2 + $0x8] sm:$0xff]
        %s707 = scalar_lea.vmem %s313, 88 [#allocation3]
        %v708 = vld [vmem:[%s707] sm:$0xf]
        %v709 = vld [vmem:[%s707 + $0x4] sm:$0xf]
        %v710 = vunpack.c.l.bf16 %v708
        %v711 = vunpack.c.l.bf16 %v709
        %v712 = vpack.c.bf16 %v706, %v705
        %v714 = vsel %vm348, %v712, 0
        %716 = vmatpush.bf16.msra.mxu0 0
        %717 = vmatpush.bf16.msra.mxu0 0
        %718 = vmatpush.bf16.msra.mxu0 0
        %719 = vmatpush.bf16.msra.mxu0 0
        %720 = vmatpush.bf16.msra.mxu0 0
        %721 = vmatpush.bf16.msra.mxu0 0
        %722 = vmatpush.bf16.msra.mxu0 %v370
        %723 = vmatpush.bf16.msra.mxu0 %v369
        %724 = vmatmul.bf16.gmra.mxu0 %v714
        %v725 = vpop.f32.mrf.mxu0
        %v726 = vadd.f32 %v342, %v725
        %v727 = vpop.f32.mrf.mxu0
        %v728 = vadd.f32 %v342, %v727
        %729 = vdwg.mxu0
        %v730 = vmax.f32 %v726, 0.0
        %v731 = vmax.f32 %v728, 0.0
        %v732 = vadd.f32 %v730, %v710
        %v733 = vadd.f32 %v731, %v711
        %s734 = scalar_lea.vmem %s332, 176 [#allocation4]
        %735 = vst.msk [vmem:[%s734] sm:$0xff] %vm348, %v732
        %736 = vst.msk [vmem:[%s734 + $0x8] sm:$0xff] %vm348, %v733
        %737 = vst.msk [vmem:[#allocation2] sm:$0xff] %vm348, %v732
        %738 = vst.msk [vmem:[#allocation2 + $0x8] sm:$0xff] %vm348, %v733
        %v739 = vld [vmem:[#allocation2] sm:$0xff]
        %v740 = vld [vmem:[#allocation2 + $0x8] sm:$0xff]
        %s741 = scalar_lea.vmem %s313, 96 [#allocation3]
        %v742 = vld [vmem:[%s741] sm:$0xf]
        %v743 = vld [vmem:[%s741 + $0x4] sm:$0xf]
        %v744 = vunpack.c.l.bf16 %v742
        %v745 = vunpack.c.l.bf16 %v743
        %v746 = vpack.c.bf16 %v740, %v739
        %v748 = vsel %vm348, %v746, 0
        %750 = vmatpush.bf16.msra.mxu0 0
        %751 = vmatpush.bf16.msra.mxu0 0
        %752 = vmatpush.bf16.msra.mxu0 0
        %753 = vmatpush.bf16.msra.mxu0 0
        %754 = vmatpush.bf16.msra.mxu0 0
        %755 = vmatpush.bf16.msra.mxu0 0
        %756 = vmatpush.bf16.msra.mxu0 %v370
        %757 = vmatpush.bf16.msra.mxu0 %v369
        %758 = vmatmul.bf16.gmra.mxu0 %v748
        %v759 = vpop.f32.mrf.mxu0
        %v760 = vadd.f32 %v342, %v759
        %v761 = vpop.f32.mrf.mxu0
        %v762 = vadd.f32 %v342, %v761
        %763 = vdwg.mxu0
        %v764 = vmax.f32 %v760, 0.0
        %v765 = vmax.f32 %v762, 0.0
        %v766 = vadd.f32 %v764, %v744
        %v767 = vadd.f32 %v765, %v745
        %s768 = scalar_lea.vmem %s332, 192 [#allocation4]
        %769 = vst.msk [vmem:[%s768] sm:$0xff] %vm348, %v766
        %770 = vst.msk [vmem:[%s768 + $0x8] sm:$0xff] %vm348, %v767
        %771 = vst.msk [vmem:[#allocation2] sm:$0xff] %vm348, %v766
        %772 = vst.msk [vmem:[#allocation2 + $0x8] sm:$0xff] %vm348, %v767
        %v773 = vld [vmem:[#allocation2] sm:$0xff]
        %v774 = vld [vmem:[#allocation2 + $0x8] sm:$0xff]
        %s775 = scalar_lea.vmem %s313, 104 [#allocation3]
        %v776 = vld [vmem:[%s775] sm:$0xf]
        %v777 = vld [vmem:[%s775 + $0x4] sm:$0xf]
        %v778 = vunpack.c.l.bf16 %v776
        %v779 = vunpack.c.l.bf16 %v777
        %v780 = vpack.c.bf16 %v774, %v773
        %v782 = vsel %vm348, %v780, 0
        %784 = vmatpush.bf16.msra.mxu0 0
        %785 = vmatpush.bf16.msra.mxu0 0
        %786 = vmatpush.bf16.msra.mxu0 0
        %787 = vmatpush.bf16.msra.mxu0 0
        %788 = vmatpush.bf16.msra.mxu0 0
        %789 = vmatpush.bf16.msra.mxu0 0
        %790 = vmatpush.bf16.msra.mxu0 %v370
        %791 = vmatpush.bf16.msra.mxu0 %v369
        %792 = vmatmul.bf16.gmra.mxu0 %v782
        %v793 = vpop.f32.mrf.mxu0
        %v794 = vadd.f32 %v342, %v793
        %v795 = vpop.f32.mrf.mxu0
        %v796 = vadd.f32 %v342, %v795
        %797 = vdwg.mxu0
        %v798 = vmax.f32 %v794, 0.0
        %v799 = vmax.f32 %v796, 0.0
        %v800 = vadd.f32 %v798, %v778
        %v801 = vadd.f32 %v799, %v779
        %s802 = scalar_lea.vmem %s332, 208 [#allocation4]
        %803 = vst.msk [vmem:[%s802] sm:$0xff] %vm348, %v800
        %804 = vst.msk [vmem:[%s802 + $0x8] sm:$0xff] %vm348, %v801
        %805 = vst.msk [vmem:[#allocation2] sm:$0xff] %vm348, %v800
        %806 = vst.msk [vmem:[#allocation2 + $0x8] sm:$0xff] %vm348, %v801
        %v807 = vld [vmem:[#allocation2] sm:$0xff]
        %v808 = vld [vmem:[#allocation2 + $0x8] sm:$0xff]
        %s809 = scalar_lea.vmem %s313, 112 [#allocation3]
        %v810 = vld [vmem:[%s809] sm:$0xf]
        %v811 = vld [vmem:[%s809 + $0x4] sm:$0xf]
        %v812 = vunpack.c.l.bf16 %v810
        %v813 = vunpack.c.l.bf16 %v811
        %v814 = vpack.c.bf16 %v808, %v807
        %v816 = vsel %vm348, %v814, 0
        %818 = vmatpush.bf16.msra.mxu0 0
        %819 = vmatpush.bf16.msra.mxu0 0
        %820 = vmatpush.bf16.msra.mxu0 0
        %821 = vmatpush.bf16.msra.mxu0 0
        %822 = vmatpush.bf16.msra.mxu0 0
        %823 = vmatpush.bf16.msra.mxu0 0
        %824 = vmatpush.bf16.msra.mxu0 %v370
        %825 = vmatpush.bf16.msra.mxu0 %v369
        %826 = vmatmul.bf16.gmra.mxu0 %v816
        %v827 = vpop.f32.mrf.mxu0
        %v828 = vadd.f32 %v342, %v827
        %v829 = vpop.f32.mrf.mxu0
        %v830 = vadd.f32 %v342, %v829
        %831 = vdwg.mxu0
        %v832 = vmax.f32 %v828, 0.0
        %v833 = vmax.f32 %v830, 0.0
        %v834 = vadd.f32 %v832, %v812
        %v835 = vadd.f32 %v833, %v813
        %s836 = scalar_lea.vmem %s332, 224 [#allocation4]
        %837 = vst.msk [vmem:[%s836] sm:$0xff] %vm348, %v834
        %838 = vst.msk [vmem:[%s836 + $0x8] sm:$0xff] %vm348, %v835
        %839 = vst.msk [vmem:[#allocation2] sm:$0xff] %vm348, %v834
        %840 = vst.msk [vmem:[#allocation2 + $0x8] sm:$0xff] %vm348, %v835
        %v841 = vld [vmem:[#allocation2] sm:$0xff]
        %v842 = vld [vmem:[#allocation2 + $0x8] sm:$0xff]
        %s843 = scalar_lea.vmem %s313, 120 [#allocation3]
        %v844 = vld [vmem:[%s843] sm:$0xf]
        %v845 = vld [vmem:[%s843 + $0x4] sm:$0xf]
        %v846 = vunpack.c.l.bf16 %v844
        %v847 = vunpack.c.l.bf16 %v845
        %v848 = vpack.c.bf16 %v842, %v841
        %v850 = vsel %vm348, %v848, 0
        %852 = vmatpush.bf16.msra.mxu0 0
        %853 = vmatpush.bf16.msra.mxu0 0
        %854 = vmatpush.bf16.msra.mxu0 0
        %855 = vmatpush.bf16.msra.mxu0 0
        %856 = vmatpush.bf16.msra.mxu0 0
        %857 = vmatpush.bf16.msra.mxu0 0
        %858 = vmatpush.bf16.msra.mxu0 %v370
        %859 = vmatpush.bf16.msra.mxu0 %v369
        %860 = vmatmul.bf16.gmra.mxu0 %v850
        %v861 = vpop.f32.mrf.mxu0
        %v862 = vadd.f32 %v342, %v861
        %v863 = vpop.f32.mrf.mxu0
        %v864 = vadd.f32 %v342, %v863
        %865 = vdwg.mxu0
        %v866 = vmax.f32 %v862, 0.0
        %v867 = vmax.f32 %v864, 0.0
        %v868 = vadd.f32 %v866, %v846
        %v869 = vadd.f32 %v867, %v847
        %s870 = scalar_lea.vmem %s332, 240 [#allocation4]
        %871 = vst.msk [vmem:[%s870] sm:$0xff] %vm348, %v868
        %872 = vst.msk [vmem:[%s870 + $0x8] sm:$0xff] %vm348, %v869
        %873 = vst.msk [vmem:[#allocation2] sm:$0xff] %vm348, %v868
        %874 = vst.msk [vmem:[#allocation2 + $0x8] sm:$0xff] %vm348, %v869
        %v875 = vld [vmem:[#allocation2] sm:$0xff]
        %v876 = vld [vmem:[#allocation2 + $0x8] sm:$0xff]
        %v877 = vld [vmem:[%s836] sm:$0xff]
        %v878 = vld [vmem:[%s836 + $0x8] sm:$0xff]
        %v879 = vpack.c.bf16 %v876, %v875
        %v881 = vsel %vm348, %v879, 0
        %883 = vmatpush.bf16.msra.mxu0 0
        %884 = vmatpush.bf16.msra.mxu0 0
        %885 = vmatpush.bf16.msra.mxu0 0
        %886 = vmatpush.bf16.msra.mxu0 0
        %887 = vmatpush.bf16.msra.mxu0 0
        %888 = vmatpush.bf16.msra.mxu0 0
        %889 = vmatpush.bf16.msra.mxu0 %v370
        %890 = vmatpush.bf16.msra.mxu0 %v369
        %891 = vmatmul.bf16.gmra.mxu0 %v881
        %v892 = vpop.f32.mrf.mxu0
        %v893 = vadd.f32 %v342, %v892
        %v894 = vpop.f32.mrf.mxu0
        %v895 = vadd.f32 %v342, %v894
        %896 = vdwg.mxu0
        %v897 = vmax.f32 %v893, 0.0
        %v898 = vmax.f32 %v895, 0.0
        %v899 = vadd.f32 %v897, %v877
        %v900 = vadd.f32 %v898, %v878
        %901 = vst.msk [vmem:[%s836] sm:$0xff] %vm348, %v899
        %902 = vst.msk [vmem:[%s836 + $0x8] sm:$0xff] %vm348, %v900
        %903 = vst.msk [vmem:[#allocation2] sm:$0xff] %vm348, %v899
        %904 = vst.msk [vmem:[#allocation2 + $0x8] sm:$0xff] %vm348, %v900
        %v905 = vld [vmem:[#allocation2] sm:$0xff]
        %v906 = vld [vmem:[#allocation2 + $0x8] sm:$0xff]
        %v907 = vld [vmem:[%s802] sm:$0xff]
        %v908 = vld [vmem:[%s802 + $0x8] sm:$0xff]
        %v909 = vpack.c.bf16 %v906, %v905
        %v911 = vsel %vm348, %v909, 0
        %913 = vmatpush.bf16.msra.mxu0 0
        %914 = vmatpush.bf16.msra.mxu0 0
        %915 = vmatpush.bf16.msra.mxu0 0
        %916 = vmatpush.bf16.msra.mxu0 0
        %917 = vmatpush.bf16.msra.mxu0 0
        %918 = vmatpush.bf16.msra.mxu0 0
        %919 = vmatpush.bf16.msra.mxu0 %v370
        %920 = vmatpush.bf16.msra.mxu0 %v369
        %921 = vmatmul.bf16.gmra.mxu0 %v911
        %v922 = vpop.f32.mrf.mxu0
        %v923 = vadd.f32 %v342, %v922
        %v924 = vpop.f32.mrf.mxu0
        %v925 = vadd.f32 %v342, %v924
        %926 = vdwg.mxu0
        %v927 = vmax.f32 %v923, 0.0
        %v928 = vmax.f32 %v925, 0.0
        %v929 = vadd.f32 %v927, %v907
        %v930 = vadd.f32 %v928, %v908
        %931 = vst.msk [vmem:[%s802] sm:$0xff] %vm348, %v929
        %932 = vst.msk [vmem:[%s802 + $0x8] sm:$0xff] %vm348, %v930
        %933 = vst.msk [vmem:[#allocation2] sm:$0xff] %vm348, %v929
        %934 = vst.msk [vmem:[#allocation2 + $0x8] sm:$0xff] %vm348, %v930
        %v935 = vld [vmem:[#allocation2] sm:$0xff]
        %v936 = vld [vmem:[#allocation2 + $0x8] sm:$0xff]
        %v937 = vld [vmem:[%s768] sm:$0xff]
        %v938 = vld [vmem:[%s768 + $0x8] sm:$0xff]
        %v939 = vpack.c.bf16 %v936, %v935
        %v941 = vsel %vm348, %v939, 0
        %943 = vmatpush.bf16.msra.mxu0 0
        %944 = vmatpush.bf16.msra.mxu0 0
        %945 = vmatpush.bf16.msra.mxu0 0
        %946 = vmatpush.bf16.msra.mxu0 0
        %947 = vmatpush.bf16.msra.mxu0 0
        %948 = vmatpush.bf16.msra.mxu0 0
        %949 = vmatpush.bf16.msra.mxu0 %v370
        %950 = vmatpush.bf16.msra.mxu0 %v369
        %951 = vmatmul.bf16.gmra.mxu0 %v941
        %v952 = vpop.f32.mrf.mxu0
        %v953 = vadd.f32 %v342, %v952
        %v954 = vpop.f32.mrf.mxu0
        %v955 = vadd.f32 %v342, %v954
        %956 = vdwg.mxu0
        %v957 = vmax.f32 %v953, 0.0
        %v958 = vmax.f32 %v955, 0.0
        %v959 = vadd.f32 %v957, %v937
        %v960 = vadd.f32 %v958, %v938
        %961 = vst.msk [vmem:[%s768] sm:$0xff] %vm348, %v959
        %962 = vst.msk [vmem:[%s768 + $0x8] sm:$0xff] %vm348, %v960
        %963 = vst.msk [vmem:[#allocation2] sm:$0xff] %vm348, %v959
        %964 = vst.msk [vmem:[#allocation2 + $0x8] sm:$0xff] %vm348, %v960
        %v965 = vld [vmem:[#allocation2] sm:$0xff]
        %v966 = vld [vmem:[#allocation2 + $0x8] sm:$0xff]
        %v967 = vld [vmem:[%s734] sm:$0xff]
        %v968 = vld [vmem:[%s734 + $0x8] sm:$0xff]
        %v969 = vpack.c.bf16 %v966, %v965
        %v971 = vsel %vm348, %v969, 0
        %973 = vmatpush.bf16.msra.mxu0 0
        %974 = vmatpush.bf16.msra.mxu0 0
        %975 = vmatpush.bf16.msra.mxu0 0
        %976 = vmatpush.bf16.msra.mxu0 0
        %977 = vmatpush.bf16.msra.mxu0 0
        %978 = vmatpush.bf16.msra.mxu0 0
        %979 = vmatpush.bf16.msra.mxu0 %v370
        %980 = vmatpush.bf16.msra.mxu0 %v369
        %981 = vmatmul.bf16.gmra.mxu0 %v971
        %v982 = vpop.f32.mrf.mxu0
        %v983 = vadd.f32 %v342, %v982
        %v984 = vpop.f32.mrf.mxu0
        %v985 = vadd.f32 %v342, %v984
        %986 = vdwg.mxu0
        %v987 = vmax.f32 %v983, 0.0
        %v988 = vmax.f32 %v985, 0.0
        %v989 = vadd.f32 %v987, %v967
        %v990 = vadd.f32 %v988, %v968
        %991 = vst.msk [vmem:[%s734] sm:$0xff] %vm348, %v989
        %992 = vst.msk [vmem:[%s734 + $0x8] sm:$0xff] %vm348, %v990
        %993 = vst.msk [vmem:[#allocation2] sm:$0xff] %vm348, %v989
        %994 = vst.msk [vmem:[#allocation2 + $0x8] sm:$0xff] %vm348, %v990
        %v995 = vld [vmem:[#allocation2] sm:$0xff]
        %v996 = vld [vmem:[#allocation2 + $0x8] sm:$0xff]
        %v997 = vld [vmem:[%s700] sm:$0xff]
        %v998 = vld [vmem:[%s700 + $0x8] sm:$0xff]
        %v999 = vpack.c.bf16 %v996, %v995
        %v1001 = vsel %vm348, %v999, 0
        %1003 = vmatpush.bf16.msra.mxu0 0
        %1004 = vmatpush.bf16.msra.mxu0 0
        %1005 = vmatpush.bf16.msra.mxu0 0
        %1006 = vmatpush.bf16.msra.mxu0 0
        %1007 = vmatpush.bf16.msra.mxu0 0
        %1008 = vmatpush.bf16.msra.mxu0 0
        %1009 = vmatpush.bf16.msra.mxu0 %v370
        %1010 = vmatpush.bf16.msra.mxu0 %v369
        %1011 = vmatmul.bf16.gmra.mxu0 %v1001
        %v1012 = vpop.f32.mrf.mxu0
        %v1013 = vadd.f32 %v342, %v1012
        %v1014 = vpop.f32.mrf.mxu0
        %v1015 = vadd.f32 %v342, %v1014
        %1016 = vdwg.mxu0
        %v1017 = vmax.f32 %v1013, 0.0
        %v1018 = vmax.f32 %v1015, 0.0
        %v1019 = vadd.f32 %v1017, %v997
        %v1020 = vadd.f32 %v1018, %v998
        %1021 = vst.msk [vmem:[%s700] sm:$0xff] %vm348, %v1019
        %1022 = vst.msk [vmem:[%s700 + $0x8] sm:$0xff] %vm348, %v1020
        %1023 = vst.msk [vmem:[#allocation2] sm:$0xff] %vm348, %v1019
        %1024 = vst.msk [vmem:[#allocation2 + $0x8] sm:$0xff] %vm348, %v1020
        %v1025 = vld [vmem:[#allocation2] sm:$0xff]
        %v1026 = vld [vmem:[#allocation2 + $0x8] sm:$0xff]
        %v1027 = vld [vmem:[%s666] sm:$0xff]
        %v1028 = vld [vmem:[%s666 + $0x8] sm:$0xff]
        %v1029 = vpack.c.bf16 %v1026, %v1025
        %v1031 = vsel %vm348, %v1029, 0
        %1033 = vmatpush.bf16.msra.mxu0 0
        %1034 = vmatpush.bf16.msra.mxu0 0
        %1035 = vmatpush.bf16.msra.mxu0 0
        %1036 = vmatpush.bf16.msra.mxu0 0
        %1037 = vmatpush.bf16.msra.mxu0 0
        %1038 = vmatpush.bf16.msra.mxu0 0
        %1039 = vmatpush.bf16.msra.mxu0 %v370
        %1040 = vmatpush.bf16.msra.mxu0 %v369
        %1041 = vmatmul.bf16.gmra.mxu0 %v1031
        %v1042 = vpop.f32.mrf.mxu0
        %v1043 = vadd.f32 %v342, %v1042
        %v1044 = vpop.f32.mrf.mxu0
        %v1045 = vadd.f32 %v342, %v1044
        %1046 = vdwg.mxu0
        %v1047 = vmax.f32 %v1043, 0.0
        %v1048 = vmax.f32 %v1045, 0.0
        %v1049 = vadd.f32 %v1047, %v1027
        %v1050 = vadd.f32 %v1048, %v1028
        %1051 = vst.msk [vmem:[%s666] sm:$0xff] %vm348, %v1049
        %1052 = vst.msk [vmem:[%s666 + $0x8] sm:$0xff] %vm348, %v1050
        %1053 = vst.msk [vmem:[#allocation2] sm:$0xff] %vm348, %v1049
        %1054 = vst.msk [vmem:[#allocation2 + $0x8] sm:$0xff] %vm348, %v1050
        %v1055 = vld [vmem:[#allocation2] sm:$0xff]
        %v1056 = vld [vmem:[#allocation2 + $0x8] sm:$0xff]
        %v1057 = vld [vmem:[%s632] sm:$0xff]
        %v1058 = vld [vmem:[%s632 + $0x8] sm:$0xff]
        %v1059 = vpack.c.bf16 %v1056, %v1055
        %v1061 = vsel %vm348, %v1059, 0
        %1063 = vmatpush.bf16.msra.mxu0 0
        %1064 = vmatpush.bf16.msra.mxu0 0
        %1065 = vmatpush.bf16.msra.mxu0 0
        %1066 = vmatpush.bf16.msra.mxu0 0
        %1067 = vmatpush.bf16.msra.mxu0 0
        %1068 = vmatpush.bf16.msra.mxu0 0
        %1069 = vmatpush.bf16.msra.mxu0 %v370
        %1070 = vmatpush.bf16.msra.mxu0 %v369
        %1071 = vmatmul.bf16.gmra.mxu0 %v1061
        %v1072 = vpop.f32.mrf.mxu0
        %v1073 = vadd.f32 %v342, %v1072
        %v1074 = vpop.f32.mrf.mxu0
        %v1075 = vadd.f32 %v342, %v1074
        %1076 = vdwg.mxu0
        %v1077 = vmax.f32 %v1073, 0.0
        %v1078 = vmax.f32 %v1075, 0.0
        %v1079 = vadd.f32 %v1077, %v1057
        %v1080 = vadd.f32 %v1078, %v1058
        %1081 = vst.msk [vmem:[%s632] sm:$0xff] %vm348, %v1079
        %1082 = vst.msk [vmem:[%s632 + $0x8] sm:$0xff] %vm348, %v1080
        %1083 = vst.msk [vmem:[#allocation2] sm:$0xff] %vm348, %v1079
        %1084 = vst.msk [vmem:[#allocation2 + $0x8] sm:$0xff] %vm348, %v1080
        %v1085 = vld [vmem:[#allocation2] sm:$0xff]
        %v1086 = vld [vmem:[#allocation2 + $0x8] sm:$0xff]
        %v1087 = vld [vmem:[%s598] sm:$0xff]
        %v1088 = vld [vmem:[%s598 + $0x8] sm:$0xff]
        %v1089 = vpack.c.bf16 %v1086, %v1085
        %v1091 = vsel %vm348, %v1089, 0
        %1093 = vmatpush.bf16.msra.mxu0 0
        %1094 = vmatpush.bf16.msra.mxu0 0
        %1095 = vmatpush.bf16.msra.mxu0 0
        %1096 = vmatpush.bf16.msra.mxu0 0
        %1097 = vmatpush.bf16.msra.mxu0 0
        %1098 = vmatpush.bf16.msra.mxu0 0
        %1099 = vmatpush.bf16.msra.mxu0 %v370
        %1100 = vmatpush.bf16.msra.mxu0 %v369
        %1101 = vmatmul.bf16.gmra.mxu0 %v1091
        %v1102 = vpop.f32.mrf.mxu0
        %v1103 = vadd.f32 %v342, %v1102
        %v1104 = vpop.f32.mrf.mxu0
        %v1105 = vadd.f32 %v342, %v1104
        %1106 = vdwg.mxu0
        %v1107 = vmax.f32 %v1103, 0.0
        %v1108 = vmax.f32 %v1105, 0.0
        %v1109 = vadd.f32 %v1107, %v1087
        %v1110 = vadd.f32 %v1108, %v1088
        %1111 = vst.msk [vmem:[%s598] sm:$0xff] %vm348, %v1109
        %1112 = vst.msk [vmem:[%s598 + $0x8] sm:$0xff] %vm348, %v1110
        %1113 = vst.msk [vmem:[#allocation2] sm:$0xff] %vm348, %v1109
        %1114 = vst.msk [vmem:[#allocation2 + $0x8] sm:$0xff] %vm348, %v1110
        %v1115 = vld [vmem:[#allocation2] sm:$0xff]
        %v1116 = vld [vmem:[#allocation2 + $0x8] sm:$0xff]
        %v1117 = vld [vmem:[%s564] sm:$0xff]
        %v1118 = vld [vmem:[%s564 + $0x8] sm:$0xff]
        %v1119 = vpack.c.bf16 %v1116, %v1115
        %v1121 = vsel %vm348, %v1119, 0
        %1123 = vmatpush.bf16.msra.mxu0 0
        %1124 = vmatpush.bf16.msra.mxu0 0
        %1125 = vmatpush.bf16.msra.mxu0 0
        %1126 = vmatpush.bf16.msra.mxu0 0
        %1127 = vmatpush.bf16.msra.mxu0 0
        %1128 = vmatpush.bf16.msra.mxu0 0
        %1129 = vmatpush.bf16.msra.mxu0 %v370
        %1130 = vmatpush.bf16.msra.mxu0 %v369
        %1131 = vmatmul.bf16.gmra.mxu0 %v1121
        %v1132 = vpop.f32.mrf.mxu0
        %v1133 = vadd.f32 %v342, %v1132
        %v1134 = vpop.f32.mrf.mxu0
        %v1135 = vadd.f32 %v342, %v1134
        %1136 = vdwg.mxu0
        %v1137 = vmax.f32 %v1133, 0.0
        %v1138 = vmax.f32 %v1135, 0.0
        %v1139 = vadd.f32 %v1137, %v1117
        %v1140 = vadd.f32 %v1138, %v1118
        %1141 = vst.msk [vmem:[%s564] sm:$0xff] %vm348, %v1139
        %1142 = vst.msk [vmem:[%s564 + $0x8] sm:$0xff] %vm348, %v1140
        %1143 = vst.msk [vmem:[#allocation2] sm:$0xff] %vm348, %v1139
        %1144 = vst.msk [vmem:[#allocation2 + $0x8] sm:$0xff] %vm348, %v1140
        %v1145 = vld [vmem:[#allocation2] sm:$0xff]
        %v1146 = vld [vmem:[#allocation2 + $0x8] sm:$0xff]
        %v1147 = vld [vmem:[%s530] sm:$0xff]
        %v1148 = vld [vmem:[%s530 + $0x8] sm:$0xff]
        %v1149 = vpack.c.bf16 %v1146, %v1145
        %v1151 = vsel %vm348, %v1149, 0
        %1153 = vmatpush.bf16.msra.mxu0 0
        %1154 = vmatpush.bf16.msra.mxu0 0
        %1155 = vmatpush.bf16.msra.mxu0 0
        %1156 = vmatpush.bf16.msra.mxu0 0
        %1157 = vmatpush.bf16.msra.mxu0 0
        %1158 = vmatpush.bf16.msra.mxu0 0
        %1159 = vmatpush.bf16.msra.mxu0 %v370
        %1160 = vmatpush.bf16.msra.mxu0 %v369
        %1161 = vmatmul.bf16.gmra.mxu0 %v1151
        %v1162 = vpop.f32.mrf.mxu0
        %v1163 = vadd.f32 %v342, %v1162
        %v1164 = vpop.f32.mrf.mxu0
        %v1165 = vadd.f32 %v342, %v1164
        %1166 = vdwg.mxu0
        %v1167 = vmax.f32 %v1163, 0.0
        %v1168 = vmax.f32 %v1165, 0.0
        %v1169 = vadd.f32 %v1167, %v1147
        %v1170 = vadd.f32 %v1168, %v1148
        %1171 = vst.msk [vmem:[%s530] sm:$0xff] %vm348, %v1169
        %1172 = vst.msk [vmem:[%s530 + $0x8] sm:$0xff] %vm348, %v1170
        %1173 = vst.msk [vmem:[#allocation2] sm:$0xff] %vm348, %v1169
        %1174 = vst.msk [vmem:[#allocation2 + $0x8] sm:$0xff] %vm348, %v1170
        %v1175 = vld [vmem:[#allocation2] sm:$0xff]
        %v1176 = vld [vmem:[#allocation2 + $0x8] sm:$0xff]
        %v1177 = vld [vmem:[%s496] sm:$0xff]
        %v1178 = vld [vmem:[%s496 + $0x8] sm:$0xff]
        %v1179 = vpack.c.bf16 %v1176, %v1175
        %v1181 = vsel %vm348, %v1179, 0
        %1183 = vmatpush.bf16.msra.mxu0 0
        %1184 = vmatpush.bf16.msra.mxu0 0
        %1185 = vmatpush.bf16.msra.mxu0 0
        %1186 = vmatpush.bf16.msra.mxu0 0
        %1187 = vmatpush.bf16.msra.mxu0 0
        %1188 = vmatpush.bf16.msra.mxu0 0
        %1189 = vmatpush.bf16.msra.mxu0 %v370
        %1190 = vmatpush.bf16.msra.mxu0 %v369
        %1191 = vmatmul.bf16.gmra.mxu0 %v1181
        %v1192 = vpop.f32.mrf.mxu0
        %v1193 = vadd.f32 %v342, %v1192
        %v1194 = vpop.f32.mrf.mxu0
        %v1195 = vadd.f32 %v342, %v1194
        %1196 = vdwg.mxu0
        %v1197 = vmax.f32 %v1193, 0.0
        %v1198 = vmax.f32 %v1195, 0.0
        %v1199 = vadd.f32 %v1197, %v1177
        %v1200 = vadd.f32 %v1198, %v1178
        %1201 = vst.msk [vmem:[%s496] sm:$0xff] %vm348, %v1199
        %1202 = vst.msk [vmem:[%s496 + $0x8] sm:$0xff] %vm348, %v1200
        %1203 = vst.msk [vmem:[#allocation2] sm:$0xff] %vm348, %v1199
        %1204 = vst.msk [vmem:[#allocation2 + $0x8] sm:$0xff] %vm348, %v1200
        %v1205 = vld [vmem:[#allocation2] sm:$0xff]
        %v1206 = vld [vmem:[#allocation2 + $0x8] sm:$0xff]
        %v1207 = vld [vmem:[%s462] sm:$0xff]
        %v1208 = vld [vmem:[%s462 + $0x8] sm:$0xff]
        %v1209 = vpack.c.bf16 %v1206, %v1205
        %v1211 = vsel %vm348, %v1209, 0
        %1213 = vmatpush.bf16.msra.mxu0 0
        %1214 = vmatpush.bf16.msra.mxu0 0
        %1215 = vmatpush.bf16.msra.mxu0 0
        %1216 = vmatpush.bf16.msra.mxu0 0
        %1217 = vmatpush.bf16.msra.mxu0 0
        %1218 = vmatpush.bf16.msra.mxu0 0
        %1219 = vmatpush.bf16.msra.mxu0 %v370
        %1220 = vmatpush.bf16.msra.mxu0 %v369
        %1221 = vmatmul.bf16.gmra.mxu0 %v1211
        %v1222 = vpop.f32.mrf.mxu0
        %v1223 = vadd.f32 %v342, %v1222
        %v1224 = vpop.f32.mrf.mxu0
        %v1225 = vadd.f32 %v342, %v1224
        %1226 = vdwg.mxu0
        %v1227 = vmax.f32 %v1223, 0.0
        %v1228 = vmax.f32 %v1225, 0.0
        %v1229 = vadd.f32 %v1227, %v1207
        %v1230 = vadd.f32 %v1228, %v1208
        %1231 = vst.msk [vmem:[%s462] sm:$0xff] %vm348, %v1229
        %1232 = vst.msk [vmem:[%s462 + $0x8] sm:$0xff] %vm348, %v1230
        %1233 = vst.msk [vmem:[#allocation2] sm:$0xff] %vm348, %v1229
        %1234 = vst.msk [vmem:[#allocation2 + $0x8] sm:$0xff] %vm348, %v1230
        %v1235 = vld [vmem:[#allocation2] sm:$0xff]
        %v1236 = vld [vmem:[#allocation2 + $0x8] sm:$0xff]
        %v1237 = vld [vmem:[%s428] sm:$0xff]
        %v1238 = vld [vmem:[%s428 + $0x8] sm:$0xff]
        %v1239 = vpack.c.bf16 %v1236, %v1235
        %v1241 = vsel %vm348, %v1239, 0
        %1243 = vmatpush.bf16.msra.mxu0 0
        %1244 = vmatpush.bf16.msra.mxu0 0
        %1245 = vmatpush.bf16.msra.mxu0 0
        %1246 = vmatpush.bf16.msra.mxu0 0
        %1247 = vmatpush.bf16.msra.mxu0 0
        %1248 = vmatpush.bf16.msra.mxu0 0
        %1249 = vmatpush.bf16.msra.mxu0 %v370
        %1250 = vmatpush.bf16.msra.mxu0 %v369
        %1251 = vmatmul.bf16.gmra.mxu0 %v1241
        %v1252 = vpop.f32.mrf.mxu0
        %v1253 = vadd.f32 %v342, %v1252
        %v1254 = vpop.f32.mrf.mxu0
        %v1255 = vadd.f32 %v342, %v1254
        %1256 = vdwg.mxu0
        %v1257 = vmax.f32 %v1253, 0.0
        %v1258 = vmax.f32 %v1255, 0.0
        %v1259 = vadd.f32 %v1257, %v1237
        %v1260 = vadd.f32 %v1258, %v1238
        %1261 = vst.msk [vmem:[%s428] sm:$0xff] %vm348, %v1259
        %1262 = vst.msk [vmem:[%s428 + $0x8] sm:$0xff] %vm348, %v1260
        %1263 = vst.msk [vmem:[#allocation2] sm:$0xff] %vm348, %v1259
        %1264 = vst.msk [vmem:[#allocation2 + $0x8] sm:$0xff] %vm348, %v1260
        %v1265 = vld [vmem:[#allocation2] sm:$0xff]
        %v1266 = vld [vmem:[#allocation2 + $0x8] sm:$0xff]
        %v1267 = vld [vmem:[%s394] sm:$0xff]
        %v1268 = vld [vmem:[%s394 + $0x8] sm:$0xff]
        %v1269 = vpack.c.bf16 %v1266, %v1265
        %v1271 = vsel %vm348, %v1269, 0
        %1273 = vmatpush.bf16.msra.mxu0 0
        %1274 = vmatpush.bf16.msra.mxu0 0
        %1275 = vmatpush.bf16.msra.mxu0 0
        %1276 = vmatpush.bf16.msra.mxu0 0
        %1277 = vmatpush.bf16.msra.mxu0 0
        %1278 = vmatpush.bf16.msra.mxu0 0
        %1279 = vmatpush.bf16.msra.mxu0 %v370
        %1280 = vmatpush.bf16.msra.mxu0 %v369
        %1281 = vmatmul.bf16.gmra.mxu0 %v1271
        %v1282 = vpop.f32.mrf.mxu0
        %v1283 = vadd.f32 %v342, %v1282
        %v1284 = vpop.f32.mrf.mxu0
        %v1285 = vadd.f32 %v342, %v1284
        %1286 = vdwg.mxu0
        %v1287 = vmax.f32 %v1283, 0.0
        %v1288 = vmax.f32 %v1285, 0.0
        %v1289 = vadd.f32 %v1287, %v1267
        %v1290 = vadd.f32 %v1288, %v1268
        %1291 = vst.msk [vmem:[%s394] sm:$0xff] %vm348, %v1289
        %1292 = vst.msk [vmem:[%s394 + $0x8] sm:$0xff] %vm348, %v1290
        %1293 = vst.msk [vmem:[#allocation2] sm:$0xff] %vm348, %v1289
        %1294 = vst.msk [vmem:[#allocation2 + $0x8] sm:$0xff] %vm348, %v1290
        %v1295 = vld [vmem:[#allocation2] sm:$0xff]
        %v1296 = vld [vmem:[#allocation2 + $0x8] sm:$0xff]
        %v1297 = vld [vmem:[%s332] sm:$0xff]
        %v1298 = vld [vmem:[%s332 + $0x8] sm:$0xff]
        %v1299 = vpack.c.bf16 %v1296, %v1295
        %v1301 = vsel %vm348, %v1299, 0
        %1303 = vmatpush.bf16.msra.mxu0 0
        %1304 = vmatpush.bf16.msra.mxu0 0
        %1305 = vmatpush.bf16.msra.mxu0 0
        %1306 = vmatpush.bf16.msra.mxu0 0
        %1307 = vmatpush.bf16.msra.mxu0 0
        %1308 = vmatpush.bf16.msra.mxu0 0
        %1309 = vmatpush.bf16.msra.mxu0 %v370
        %1310 = vmatpush.bf16.msra.mxu0 %v369
        %1311 = vmatmul.bf16.gmra.mxu0 %v1301
        %v1312 = vpop.f32.mrf.mxu0
        %v1313 = vadd.f32 %v342, %v1312
        %v1314 = vpop.f32.mrf.mxu0
        %v1315 = vadd.f32 %v342, %v1314
        %1316 = vdwg.mxu0
        %v1317 = vmax.f32 %v1313, 0.0
        %v1318 = vmax.f32 %v1315, 0.0
        %v1319 = vadd.f32 %v1317, %v1297
        %v1320 = vadd.f32 %v1318, %v1298
        %1321 = vst.msk [vmem:[%s332] sm:$0xff] %vm348, %v1319
        %1322 = vst.msk [vmem:[%s332 + $0x8] sm:$0xff] %vm348, %v1320
        %1323 = vst.msk [vmem:[#allocation2] sm:$0xff] %vm348, %v1319
        %1324 = vst.msk [vmem:[#allocation2 + $0x8] sm:$0xff] %vm348, %v1320
        %s1325 = sand.u32 %s90, 1
        %s1326 = sand.u32 %s90, 1
        %s1327 = smul.addr %s1326, 256
        %s1328 = scalar_lea.vmem [#allocation4], %s1327
        // Predicated region
        $region74: #{conv_du_forward.1} parent=68 // pred_check
          %p1329 = pneg %p100
        $region75: #{conv_du_forward.1} parent=68 // pred_check_branch
          %1331 = sbr.rel (%p1329) target = $region77
        $region76: #{conv_du_forward.1} parent=68 // pred_region
          %s1332 = smul.u32 2, %s14
          %s1333 = smul.addr %s1332, 8
          %s1334 = scalar_lea.vmem %s3, %s1333
          // Predicated region
          $region78: #{conv_du_forward.1} parent=76 // pred_check
            _
          $region79: #{conv_du_forward.1} parent=76 // pred_check_branch
            %1336 = sbr.rel (0) target = $region81
          $region80: #{conv_du_forward.1} parent=76 // pred_region
            // Predicated region
            $region82: #{conv_du_forward.1} parent=80 // pred_check
              _
            $region83: #{conv_du_forward.1} parent=80 // pred_check_branch
              %1338 = sbr.rel (0) target = $region85
            $region84: #{conv_du_forward.1} parent=80 // pred_region
              // Predicated region
              $region97: #{conv_du_forward.1} parent=84 // pred_check
                _
              $region98: #{conv_du_forward.1} parent=84 // pred_check_branch
                %1416 = sbr.rel (0) target = $region100
              $region99: #{conv_du_forward.1} parent=84 // pred_region
                loop: start=0, step=1, limit=1
                $region101: #{conv_du_forward.1} parent=99 // loop_pre_header
                  _
                $region102: #{conv_du_forward.1} parent=99 // loop_header
                  %s1418 = sphi 0, %s1422
                  %p1419 = scmp.ge.s32.totalorder %s1418, 1
                  %s1423 = sphi %s1328, %s1328
                  %s1424 = sphi %s1334, %s1334
                $region103: #{conv_du_forward.1} parent=99 // loop_header_branch
                  %1421 = sbr.rel (%p1419) target = $region107
                $region104: #{conv_du_forward.1} parent=99 // loop_body
                  %v1425 = vld [vmem:[%s1423] sm:$0xff]
                  %1426 = vst [vmem:[%s1424] sm:$0xff] %v1425
                  %v1427 = vld [vmem:[%s1423 + $0x8] sm:$0xff]
                  %1428 = vst [vmem:[%s1424 + $0x8] sm:$0xff] %v1427
                  %v1429 = vld [vmem:[%s1423 + $0x10] sm:$0xff]
                  %1430 = vst [vmem:[%s1424 + $0x20] sm:$0xff] %v1429
                  %v1431 = vld [vmem:[%s1423 + $0x18] sm:$0xff]
                  %1432 = vst [vmem:[%s1424 + $0x28] sm:$0xff] %v1431
                  %v1433 = vld [vmem:[%s1423 + $0x20] sm:$0xff]
                  %1434 = vst [vmem:[%s1424 + $0x40] sm:$0xff] %v1433
                  %v1435 = vld [vmem:[%s1423 + $0x28] sm:$0xff]
                  %1436 = vst [vmem:[%s1424 + $0x48] sm:$0xff] %v1435
                  %v1437 = vld [vmem:[%s1423 + $0x30] sm:$0xff]
                  %1438 = vst [vmem:[%s1424 + $0x60] sm:$0xff] %v1437
                  %v1439 = vld [vmem:[%s1423 + $0x38] sm:$0xff]
                  %1440 = vst [vmem:[%s1424 + $0x68] sm:$0xff] %v1439
                  %v1441 = vld [vmem:[%s1423 + $0x40] sm:$0xff]
                  %1442 = vst [vmem:[%s1424 + $0x80] sm:$0xff] %v1441
                  %v1443 = vld [vmem:[%s1423 + $0x48] sm:$0xff]
                  %1444 = vst [vmem:[%s1424 + $0x88] sm:$0xff] %v1443
                  %v1445 = vld [vmem:[%s1423 + $0x50] sm:$0xff]
                  %1446 = vst [vmem:[%s1424 + $0xa0] sm:$0xff] %v1445
                  %v1447 = vld [vmem:[%s1423 + $0x58] sm:$0xff]
                  %1448 = vst [vmem:[%s1424 + $0xa8] sm:$0xff] %v1447
                  %v1449 = vld [vmem:[%s1423 + $0x60] sm:$0xff]
                  %1450 = vst [vmem:[%s1424 + $0xc0] sm:$0xff] %v1449
                  %v1451 = vld [vmem:[%s1423 + $0x68] sm:$0xff]
                  %1452 = vst [vmem:[%s1424 + $0xc8] sm:$0xff] %v1451
                  %v1453 = vld [vmem:[%s1423 + $0x70] sm:$0xff]
                  %1454 = vst [vmem:[%s1424 + $0xe0] sm:$0xff] %v1453
                  %v1455 = vld [vmem:[%s1423 + $0x78] sm:$0xff]
                  %1456 = vst [vmem:[%s1424 + $0xe8] sm:$0xff] %v1455
                  %v1457 = vld [vmem:[%s1423 + $0x80] sm:$0xff]
                  %1458 = vst [vmem:[%s1424 + $0x100] sm:$0xff] %v1457
                  %v1459 = vld [vmem:[%s1423 + $0x88] sm:$0xff]
                  %1460 = vst [vmem:[%s1424 + $0x108] sm:$0xff] %v1459
                  %v1461 = vld [vmem:[%s1423 + $0x90] sm:$0xff]
                  %1462 = vst [vmem:[%s1424 + $0x120] sm:$0xff] %v1461
                  %v1463 = vld [vmem:[%s1423 + $0x98] sm:$0xff]
                  %1464 = vst [vmem:[%s1424 + $0x128] sm:$0xff] %v1463
                  %v1465 = vld [vmem:[%s1423 + $0xa0] sm:$0xff]
                  %1466 = vst [vmem:[%s1424 + $0x140] sm:$0xff] %v1465
                  %v1467 = vld [vmem:[%s1423 + $0xa8] sm:$0xff]
                  %1468 = vst [vmem:[%s1424 + $0x148] sm:$0xff] %v1467
                  %v1469 = vld [vmem:[%s1423 + $0xb0] sm:$0xff]
                  %1470 = vst [vmem:[%s1424 + $0x160] sm:$0xff] %v1469
                  %v1471 = vld [vmem:[%s1423 + $0xb8] sm:$0xff]
                  %1472 = vst [vmem:[%s1424 + $0x168] sm:$0xff] %v1471
                  %v1473 = vld [vmem:[%s1423 + $0xc0] sm:$0xff]
                  %1474 = vst [vmem:[%s1424 + $0x180] sm:$0xff] %v1473
                  %v1475 = vld [vmem:[%s1423 + $0xc8] sm:$0xff]
                  %1476 = vst [vmem:[%s1424 + $0x188] sm:$0xff] %v1475
                  %v1477 = vld [vmem:[%s1423 + $0xd0] sm:$0xff]
                  %1478 = vst [vmem:[%s1424 + $0x1a0] sm:$0xff] %v1477
                  %v1479 = vld [vmem:[%s1423 + $0xd8] sm:$0xff]
                  %1480 = vst [vmem:[%s1424 + $0x1a8] sm:$0xff] %v1479
                  %v1481 = vld [vmem:[%s1423 + $0xe0] sm:$0xff]
                  %1482 = vst [vmem:[%s1424 + $0x1c0] sm:$0xff] %v1481
                  %v1483 = vld [vmem:[%s1423 + $0xe8] sm:$0xff]
                  %1484 = vst [vmem:[%s1424 + $0x1c8] sm:$0xff] %v1483
                  %v1485 = vld [vmem:[%s1423 + $0xf0] sm:$0xff]
                  %1486 = vst [vmem:[%s1424 + $0x1e0] sm:$0xff] %v1485
                  %v1487 = vld [vmem:[%s1423 + $0xf8] sm:$0xff]
                  %1488 = vst [vmem:[%s1424 + $0x1e8] sm:$0xff] %v1487
                $region105: #{conv_du_forward.1} parent=99 // loop_footer
                  %s1422 = sadd.s32 1, %s1418
                $region106: #{conv_du_forward.1} parent=99 // loop_footer_branch
                  %1417 = sbr.rel target = $region102
                $region107: #{conv_du_forward.1} parent=99 // loop_exit
                  _
              $region100: #{conv_du_forward.1} parent=84 // pred_fallthru
                _
              // Predicated region
              $region108: #{conv_du_forward.1} parent=84 // pred_check
                _
              $region109: #{conv_du_forward.1} parent=84 // pred_check_branch
                %1490 = sbr.rel target = $region111
              $region110: #{conv_du_forward.1} parent=84 // pred_region
                _
              $region111: #{conv_du_forward.1} parent=84 // pred_fallthru
                _
            $region85: #{conv_du_forward.1} parent=80 // pred_fallthru
              _
            // Predicated region
            $region86: #{conv_du_forward.1} parent=80 // pred_check
              _
            $region87: #{conv_du_forward.1} parent=80 // pred_check_branch
              %1340 = sbr.rel target = $region89
            $region88: #{conv_du_forward.1} parent=80 // pred_region
              %s1342 = ssub.s32 256, 1
              loop: start=0, step=1, limit=1
              $region90: #{conv_du_forward.1} parent=88 // loop_pre_header
                _
              $region91: #{conv_du_forward.1} parent=88 // loop_header
                %s1344 = sphi 0, %s1348
                %p1345 = scmp.ge.s32.totalorder %s1344, 1
                %s1349 = sphi %s1328, %s1328
                %s1350 = sphi %s1334, %s1334
              $region92: #{conv_du_forward.1} parent=88 // loop_header_branch
                %1347 = sbr.rel (%p1345) target = $region96
              $region93: #{conv_du_forward.1} parent=88 // loop_body
                %v1351 = vld [vmem:[%s1349] sm:%s1342]
                %1352 = vst [vmem:[%s1350] sm:%s1342] %v1351
                %v1353 = vld [vmem:[%s1349 + $0x8] sm:%s1342]
                %1354 = vst [vmem:[%s1350 + $0x8] sm:%s1342] %v1353
                %v1355 = vld [vmem:[%s1349 + $0x10] sm:%s1342]
                %1356 = vst [vmem:[%s1350 + $0x20] sm:%s1342] %v1355
                %v1357 = vld [vmem:[%s1349 + $0x18] sm:%s1342]
                %1358 = vst [vmem:[%s1350 + $0x28] sm:%s1342] %v1357
                %v1359 = vld [vmem:[%s1349 + $0x20] sm:%s1342]
                %1360 = vst [vmem:[%s1350 + $0x40] sm:%s1342] %v1359
                %v1361 = vld [vmem:[%s1349 + $0x28] sm:%s1342]
                %1362 = vst [vmem:[%s1350 + $0x48] sm:%s1342] %v1361
                %v1363 = vld [vmem:[%s1349 + $0x30] sm:%s1342]
                %1364 = vst [vmem:[%s1350 + $0x60] sm:%s1342] %v1363
                %v1365 = vld [vmem:[%s1349 + $0x38] sm:%s1342]
                %1366 = vst [vmem:[%s1350 + $0x68] sm:%s1342] %v1365
                %v1367 = vld [vmem:[%s1349 + $0x40] sm:%s1342]
                %1368 = vst [vmem:[%s1350 + $0x80] sm:%s1342] %v1367
                %v1369 = vld [vmem:[%s1349 + $0x48] sm:%s1342]
                %1370 = vst [vmem:[%s1350 + $0x88] sm:%s1342] %v1369
                %v1371 = vld [vmem:[%s1349 + $0x50] sm:%s1342]
                %1372 = vst [vmem:[%s1350 + $0xa0] sm:%s1342] %v1371
                %v1373 = vld [vmem:[%s1349 + $0x58] sm:%s1342]
                %1374 = vst [vmem:[%s1350 + $0xa8] sm:%s1342] %v1373
                %v1375 = vld [vmem:[%s1349 + $0x60] sm:%s1342]
                %1376 = vst [vmem:[%s1350 + $0xc0] sm:%s1342] %v1375
                %v1377 = vld [vmem:[%s1349 + $0x68] sm:%s1342]
                %1378 = vst [vmem:[%s1350 + $0xc8] sm:%s1342] %v1377
                %v1379 = vld [vmem:[%s1349 + $0x70] sm:%s1342]
                %1380 = vst [vmem:[%s1350 + $0xe0] sm:%s1342] %v1379
                %v1381 = vld [vmem:[%s1349 + $0x78] sm:%s1342]
                %1382 = vst [vmem:[%s1350 + $0xe8] sm:%s1342] %v1381
                %v1383 = vld [vmem:[%s1349 + $0x80] sm:%s1342]
                %1384 = vst [vmem:[%s1350 + $0x100] sm:%s1342] %v1383
                %v1385 = vld [vmem:[%s1349 + $0x88] sm:%s1342]
                %1386 = vst [vmem:[%s1350 + $0x108] sm:%s1342] %v1385
                %v1387 = vld [vmem:[%s1349 + $0x90] sm:%s1342]
                %1388 = vst [vmem:[%s1350 + $0x120] sm:%s1342] %v1387
                %v1389 = vld [vmem:[%s1349 + $0x98] sm:%s1342]
                %1390 = vst [vmem:[%s1350 + $0x128] sm:%s1342] %v1389
                %v1391 = vld [vmem:[%s1349 + $0xa0] sm:%s1342]
                %1392 = vst [vmem:[%s1350 + $0x140] sm:%s1342] %v1391
                %v1393 = vld [vmem:[%s1349 + $0xa8] sm:%s1342]
                %1394 = vst [vmem:[%s1350 + $0x148] sm:%s1342] %v1393
                %v1395 = vld [vmem:[%s1349 + $0xb0] sm:%s1342]
                %1396 = vst [vmem:[%s1350 + $0x160] sm:%s1342] %v1395
                %v1397 = vld [vmem:[%s1349 + $0xb8] sm:%s1342]
                %1398 = vst [vmem:[%s1350 + $0x168] sm:%s1342] %v1397
                %v1399 = vld [vmem:[%s1349 + $0xc0] sm:%s1342]
                %1400 = vst [vmem:[%s1350 + $0x180] sm:%s1342] %v1399
                %v1401 = vld [vmem:[%s1349 + $0xc8] sm:%s1342]
                %1402 = vst [vmem:[%s1350 + $0x188] sm:%s1342] %v1401
                %v1403 = vld [vmem:[%s1349 + $0xd0] sm:%s1342]
                %1404 = vst [vmem:[%s1350 + $0x1a0] sm:%s1342] %v1403
                %v1405 = vld [vmem:[%s1349 + $0xd8] sm:%s1342]
                %1406 = vst [vmem:[%s1350 + $0x1a8] sm:%s1342] %v1405
                %v1407 = vld [vmem:[%s1349 + $0xe0] sm:%s1342]
                %1408 = vst [vmem:[%s1350 + $0x1c0] sm:%s1342] %v1407
                %v1409 = vld [vmem:[%s1349 + $0xe8] sm:%s1342]
                %1410 = vst [vmem:[%s1350 + $0x1c8] sm:%s1342] %v1409
                %v1411 = vld [vmem:[%s1349 + $0xf0] sm:%s1342]
                %1412 = vst [vmem:[%s1350 + $0x1e0] sm:%s1342] %v1411
                %v1413 = vld [vmem:[%s1349 + $0xf8] sm:%s1342]
                %1414 = vst [vmem:[%s1350 + $0x1e8] sm:%s1342] %v1413
              $region94: #{conv_du_forward.1} parent=88 // loop_footer
                %s1348 = sadd.s32 1, %s1344
              $region95: #{conv_du_forward.1} parent=88 // loop_footer_branch
                %1343 = sbr.rel target = $region91
              $region96: #{conv_du_forward.1} parent=88 // loop_exit
                _
            $region89: #{conv_du_forward.1} parent=80 // pred_fallthru
              _
          $region81: #{conv_du_forward.1} parent=76 // pred_fallthru
            _
          %1491 = vnop
        $region77: #{conv_du_forward.1} parent=68 // pred_fallthru
          _
      $region69: #{conv_du_forward.1} parent=5 // pred_fallthru
        _
      %p1492 = scmp.le.s32.totalorder 2, %s9
      // Predicated region
      $region112: #{conv_du_forward.1} parent=5 // pred_check
        %p1493 = pneg %p1492
      $region113: #{conv_du_forward.1} parent=5 // pred_check_branch
        %1495 = sbr.rel (%p1493) target = $region115
      $region114: #{conv_du_forward.1} parent=5 // pred_region
        %s1496 = ssub.s32 %s9, 2
        // Predicated region
        $region116: #{conv_du_forward.1} parent=114 // pred_check
          %p1497 = pneg %p106
        $region117: #{conv_du_forward.1} parent=114 // pred_check_branch
          %1499 = sbr.rel (%p1497) target = $region119
        $region118: #{conv_du_forward.1} parent=114 // pred_region
          %s1500 = sand.u32 %s91, 1
          %s1501 = sand.u32 %s91, 1
          %s1502 = smul.addr %s1501, 256
          %s1503 = scalar_lea.vmem [#allocation4], %s1502
        $region119: #{conv_du_forward.1} parent=114 // pred_fallthru
          _
      $region115: #{conv_du_forward.1} parent=5 // pred_fallthru
        _
    $region6: #{conv_du_forward.1} parent=1 // loop_footer
      %s13 = sadd.s32 1, %s9
    $region7: #{conv_du_forward.1} parent=1 // loop_footer_branch
      %8 = sbr.rel target = $region3
    $region8: #{conv_du_forward.1} parent=1 // loop_exit
      _

</llo_original>
